<compile_context>
chip_gen: v7x
topology: tpu7x:2x2x1
jax: 0.10.0
libtpu: 0.0.40
codegen_flags: <defaults>
</compile_context>

<pallas_src>
import functools

import jax
import jax.numpy as jnp
from jax.experimental import pallas as pl
from jax.experimental.pallas import tpu as pltpu


def _resnet_block_kernel(x_ref, w1_ref, b1_ref, w2_ref, b2_ref, out_ref,
                         xbuf_ref, hbuf_ref, *maybe_col,
                         H, W, K, d0, d1, slope, use_im2col):
    C = out_ref.shape[1]
    HW = H * W
    cdt = xbuf_ref.dtype
    col_ref = maybe_col[0] if maybe_col else None

    # Column index of every flattened spatial position; masks taps that fall
    # off the left/right image edge.  Height edges are handled by the zeroed
    # pad rows of the flat scratch buffers.
    col_idx = jax.lax.broadcasted_iota(jnp.int32, (1, HW), 1) % W

    def dilated_conv(src2d, buf_ref, w_ref, b_ref, dil):
        """src2d: (Cin, HW) in compute dtype -> (Cout, HW) f32 conv output."""
        p = (K - 1) // 2 * dil                       # 'same' padding
        off = p * W + p
        L = buf_ref.shape[1]
        # Zero ONLY the pad regions, then drop the activation in the middle.
        buf_ref[:, :off] = jnp.zeros((src2d.shape[0], off), cdt)
        buf_ref[:, off + HW:L] = jnp.zeros((src2d.shape[0], L - off - HW), cdt)
        buf_ref[:, off:off + HW] = src2d

        if use_im2col:
            # Build a (K*K*Cin, HW) patch matrix so the whole conv is ONE MXU
            # matmul with a K^2-deeper contraction.  Width-invalid columns are
            # zeroed at the source, which is equivalent to the old
            # compute-then-mask since the conv is linear in the patch.
            Cin = src2d.shape[0]
            for kh in range(K):
                for kw in range(K):
                    t = kh * K + kw
                    s = kh * dil * W + kw * dil      # static lane shift
                    patch = buf_ref[:, s:s + HW]
                    shift_w = kw * dil - p
                    if shift_w != 0:                 # center column: no mask
                        valid = ((col_idx + shift_w >= 0) &
                                 (col_idx + shift_w < W))
                        patch = jnp.where(valid, patch, 0).astype(cdt)
                    col_ref[t * Cin:(t + 1) * Cin, :] = patch
            acc = jnp.dot(w_ref[...], col_ref[...],  # (Cout,KKCin)@(KKCin,HW)
                          preferred_element_type=jnp.float32)
        else:
            # Large-C path: per-tap (Cout,Cin)@(Cin,HW) matmuls already feed
            # the MXU a deep contraction; no im2col materialization traffic.
            Cout = w_ref.shape[2]
            acc = jnp.zeros((Cout, HW), jnp.float32)
            for kw in range(K):                      # static unroll
                shift_w = kw * dil - p
                partial = jnp.zeros((Cout, HW), jnp.float32)
                for kh in range(K):
                    s = kh * dil * W + kw * dil
                    patch = buf_ref[:, s:s + HW]
                    partial = partial + jnp.dot(
                        w_ref[kh, kw], patch,
                        preferred_element_type=jnp.float32)
                if shift_w == 0:                     # center tap: skip mask
                    acc = acc + partial
                else:
                    valid = ((col_idx + shift_w >= 0) &
                             (col_idx + shift_w < W))
                    acc = acc + jnp.where(valid, partial, 0.0)
        return acc + b_ref[...].astype(jnp.float32)  # (Cout,HW) + (Cout,1)

    x2d = x_ref[0]
    y1 = dilated_conv(x2d.astype(cdt), xbuf_ref, w1_ref, b1_ref, d0)
    h = jnp.where(y1 > 0, y1, slope * y1)            # LeakyReLU(0.1), f32
    y2 = dilated_conv(h.astype(cdt), hbuf_ref, w2_ref, b2_ref, d1)
    out_ref[0] = (y2 + x_ref[0].astype(jnp.float32)).astype(out_ref.dtype)


def resnet_block(x_nchw, params, dilation, *, compute_dtype=jnp.bfloat16):
    """Matches ResnetBlock.forward for NCHW input (single fused kernel).

    compute_dtype=bf16 mirrors the PyTorch @autocast() reduced-precision conv
    path using the MXU's native dtype; accumulation, bias, LeakyReLU and the
    residual add stay f32.  Pass jnp.float32 for a full-precision path.
    """
    N, C, H, W = x_nchw.shape
    K = params["w1"].shape[0]
    d0, d1 = int(dilation[0]), int(dilation[1])
    p1 = (K - 1) // 2 * d0
    p2 = (K - 1) // 2 * d1
    HW = H * W
    L1 = (H + 2 * p1) * W + 2 * p1      # height-padded flat buffer lengths
    L2 = (H + 2 * p2) * W + 2 * p2

    # Small channel counts: fold all K*K taps into one deep-contraction matmul.
    use_im2col = (K * K * C) <= 256

    x2d = x_nchw.reshape(N, C, HW)                    # free (contiguous) reshape

    if use_im2col:
        # (K,K,Cin,Cout) -> (Cout, K*K*Cin); contraction order (kh, kw, cin)
        # matches the kernel's col-matrix fill order.
        w1 = jnp.transpose(params["w1"], (3, 0, 1, 2)).reshape(C, K * K * C)
        w2 = jnp.transpose(params["w2"], (3, 0, 1, 2)).reshape(C, K * K * C)
        w_block = (C, K * K * C)
        w_map = lambda n: (0, 0)
    else:
        # (K,K,Cin,Cout) -> (K,K,Cout,Cin) so each tap is (Cout,Cin)@(Cin,HW).
        w1 = jnp.transpose(params["w1"], (0, 1, 3, 2))
        w2 = jnp.transpose(params["w2"], (0, 1, 3, 2))
        w_block = (K, K, C, C)
        w_map = lambda n: (0, 0, 0, 0)
    w1 = w1.astype(compute_dtype)
    w2 = w2.astype(compute_dtype)
    b1 = params["b1"].reshape(C, 1).astype(jnp.float32)
    b2 = params["b2"].reshape(C, 1).astype(jnp.float32)

    scratch = [pltpu.VMEM((C, L1), compute_dtype),
               pltpu.VMEM((C, L2), compute_dtype)]
    if use_im2col:
        scratch.append(pltpu.VMEM((K * K * C, HW), compute_dtype))

    # Explicit VMEM budget (v7x only has 64 MiB/TC): 2x headroom over the
    # estimated working set, clamped to 48 MiB.
    ibytes = jnp.dtype(x_nchw.dtype).itemsize
    cbytes = jnp.dtype(compute_dtype).itemsize
    est = (2 * 2 * C * HW * ibytes                    # double-buffered x / out
           + 2 * 2 * K * K * C * C * cbytes           # double-buffered weights
           + 2 * C * 4                                # biases
           + C * (L1 + L2) * cbytes                   # padded scratch
           + (K * K * C * HW * cbytes if use_im2col else 0)
           + (1 << 20))                               # compiler temporaries
    vmem_limit = int(min(max(2 * est, 32 << 20), 48 << 20))

    kern = functools.partial(_resnet_block_kernel, H=H, W=W, K=K,
                             d0=d0, d1=d1, slope=0.1, use_im2col=use_im2col)
    out = pl.pallas_call(
        kern,
        out_shape=jax.ShapeDtypeStruct((N, C, HW), x_nchw.dtype),
        grid=(N,),
        in_specs=[
            pl.BlockSpec((1, C, HW), lambda n: (n, 0, 0)),
            pl.BlockSpec(w_block, w_map),
            pl.BlockSpec((C, 1), lambda n: (0, 0)),
            pl.BlockSpec(w_block, w_map),
            pl.BlockSpec((C, 1), lambda n: (0, 0)),
        ],
        out_specs=pl.BlockSpec((1, C, HW), lambda n: (n, 0, 0)),
        scratch_shapes=scratch,
        compiler_params=pltpu.CompilerParams(
            dimension_semantics=("parallel",),
            vmem_limit_bytes=vmem_limit),
    )(x2d, w1, b1, w2, b2)
    return out.reshape(N, C, H, W)


def _reference(x_nchw, params, dilation):
    """Pure-JAX reference (lax.conv) for validation."""
    x = jnp.transpose(x_nchw, (0, 2, 3, 1))

    def conv(inp, w, b, d):
        p = (w.shape[0] - 1) // 2 * d
        y = jax.lax.conv_general_dilated(
            inp, w, (1, 1), [(p, p), (p, p)], rhs_dilation=(d, d),
            dimension_numbers=("NHWC", "HWIO", "NHWC"))
        return y + b.reshape(1, 1, 1, -1)

    h = conv(x, params["w1"], params["b1"], dilation[0])
    h = jnp.where(h > 0, h, 0.1 * h)
    y = conv(h, params["w2"], params["b2"], dilation[1]) + x
    return jnp.transpose(y, (0, 3, 1, 2))


def init_params(key, in_channels, kernel_size):
    k1, k2, k3, k4 = jax.random.split(key, 4)
    scale = 0.1
    return {
        "w1": scale * jax.random.normal(
            k1, (kernel_size, kernel_size, in_channels, in_channels), jnp.float32),
        "b1": scale * jax.random.normal(k2, (in_channels,), jnp.float32),
        "w2": scale * jax.random.normal(
            k3, (kernel_size, kernel_size, in_channels, in_channels), jnp.float32),
        "b2": scale * jax.random.normal(k4, (in_channels,), jnp.float32),
    }


if __name__ == "__main__":
    # ResnetBlock(in_channels=4, kernel_size=3, dilation=(1, 2), bias=True)
    in_channels, kernel_size, dilation = 4, 3, (1, 2)
    N, H, W = 2, 16, 16

    key = jax.random.PRNGKey(0)
    kx, kp = jax.random.split(key)
    x = jax.random.normal(kx, (N, in_channels, H, W), jnp.float32)  # NCHW
    params = init_params(kp, in_channels, kernel_size)

    ref = jax.block_until_ready(_reference(x, params, dilation))

    # Full-precision path: tight tolerance vs the lax.conv reference.
    out_f32 = jax.block_until_ready(
        resnet_block(x, params, dilation, compute_dtype=jnp.float32))
    assert out_f32.shape == x.shape and out_f32.dtype == x.dtype
    assert jnp.allclose(out_f32, ref, rtol=1e-4, atol=1e-5), "f32 mismatch"

    # Default bf16-operand path (mirrors @autocast matmul precision); f32
    # accumulation keeps the error small but not fp32-tight.
    out_bf16 = jax.block_until_ready(resnet_block(x, params, dilation))
    assert out_bf16.shape == x.shape and out_bf16.dtype == x.dtype
    assert jnp.allclose(out_bf16, ref, rtol=5e-2, atol=5e-2), "bf16 mismatch"

    print("KERNEL_OK")
</pallas_src>

<mosaic_0001>
module attributes {stable_mosaic.version = 11 : i64} {
  func.func @_resnet_block_kernel(%arg0: i32, %arg1: memref<1x4x256xf32, #tpu.memory_space<vmem>>, %arg2: memref<4x36xf32, #tpu.memory_space<vmem>>, %arg3: memref<4x1xf32, #tpu.memory_space<vmem>>, %arg4: memref<4x36xf32, #tpu.memory_space<vmem>>, %arg5: memref<4x1xf32, #tpu.memory_space<vmem>>, %arg6: memref<1x4x256xf32, #tpu.memory_space<vmem>>, %arg7: memref<4x290xf32, #tpu.memory_space<vmem>>, %arg8: memref<4x324xf32, #tpu.memory_space<vmem>>, %arg9: memref<36x256xf32, #tpu.memory_space<vmem>>) attributes {dimension_semantics = [#tpu.dimension_semantics<parallel>], iteration_bounds = array<i64: 2>, scalar_prefetch = 0 : i64, scratch_operands = 3 : i64, tpu.core_type = #tpu.core_type<tc>, window_params = [{transform_indices = @transform_0, window_bounds = array<i64: 1, 4, 256>}, {pipeline_mode = #tpu.pipeline_mode<synchronous>, transform_indices = @transform_1, window_bounds = array<i64: 4, 36>}, {pipeline_mode = #tpu.pipeline_mode<synchronous>, transform_indices = @transform_2, window_bounds = array<i64: 4, 1>}, {pipeline_mode = #tpu.pipeline_mode<synchronous>, transform_indices = @transform_3, window_bounds = array<i64: 4, 36>}, {pipeline_mode = #tpu.pipeline_mode<synchronous>, transform_indices = @transform_4, window_bounds = array<i64: 4, 1>}, {transform_indices = @transform_5, window_bounds = array<i64: 1, 4, 256>}]} {
    %0 = tpu.iota {dimensions = array<i32: 1>} : vector<1x256xi32>
    %c16_i32 = arith.constant 16 : i32
    %c0_i32 = arith.constant 0 : i32
    %1 = arith.cmpi eq, %c16_i32, %c0_i32 : i32
    %c1_i32 = arith.constant 1 : i32
    %2 = arith.select %1, %c1_i32, %c16_i32 : i32
    %3 = vector.broadcast %2 : i32 to vector<1x256xi32>
    %4 = arith.remsi %0, %3 : vector<1x256xi32>
    %c0_i32_0 = arith.constant 0 : i32
    %5 = vector.broadcast %c0_i32_0 : i32 to vector<1x256xi32>
    %6 = arith.cmpi ne, %4, %5 : vector<1x256xi32>
    %c0_i32_1 = arith.constant 0 : i32
    %7 = vector.broadcast %c0_i32_1 : i32 to vector<1x256xi32>
    %8 = arith.cmpi slt, %4, %7 : vector<1x256xi32>
    %c0_i32_2 = arith.constant 0 : i32
    %9 = arith.cmpi slt, %2, %c0_i32_2 : i32
    %10 = vector.broadcast %9 : i1 to vector<1x256xi1>
    %11 = vector.broadcast %10 : vector<1x256xi1> to vector<1x256xi1>
    %12 = arith.xori %8, %11 : vector<1x256xi1>
    %13 = arith.andi %12, %6 : vector<1x256xi1>
    %14 = vector.broadcast %2 : i32 to vector<1x256xi32>
    %15 = arith.addi %4, %14 : vector<1x256xi32>
    %16 = arith.select %13, %15, %4 : vector<1x256xi1>, vector<1x256xi32>
    %c0 = arith.constant 0 : index
    %c0_3 = arith.constant 0 : index
    %c0_4 = arith.constant 0 : index
    %17 = vector.load %arg1[%c0, %c0_3, %c0_4] : memref<1x4x256xf32, #tpu.memory_space<vmem>>, vector<1x4x256xf32>
    %18 = vector.shape_cast %17 : vector<1x4x256xf32> to vector<4x256xf32>
    %cst = arith.constant 0.000000e+00 : f32
    %19 = vector.broadcast %cst : f32 to vector<4x17xf32>
    %c0_5 = arith.constant 0 : index
    %c0_6 = arith.constant 0 : index
    %20 = vector.load %arg7[%c0_5, %c0_6] : memref<4x290xf32, #tpu.memory_space<vmem>>, vector<4x17xf32>
    tpu.vector_store %arg7[%c0_5, %c0_6], %19 {strides = array<i32>} : memref<4x290xf32, #tpu.memory_space<vmem>>, vector<4x17xf32>,
    %cst_7 = arith.constant 0.000000e+00 : f32
    %21 = vector.broadcast %cst_7 : f32 to vector<4x17xf32>
    %c0_8 = arith.constant 0 : index
    %c273 = arith.constant 273 : index
    %22 = vector.load %arg7[%c0_8, %c273] : memref<4x290xf32, #tpu.memory_space<vmem>>, vector<4x17xf32>
    tpu.vector_store %arg7[%c0_8, %c273], %21 {strides = array<i32>} : memref<4x290xf32, #tpu.memory_space<vmem>>, vector<4x17xf32>,
    %c0_9 = arith.constant 0 : index
    %c17 = arith.constant 17 : index
    %23 = vector.load %arg7[%c0_9, %c17] : memref<4x290xf32, #tpu.memory_space<vmem>>, vector<4x256xf32>
    tpu.vector_store %arg7[%c0_9, %c17], %18 {strides = array<i32>} : memref<4x290xf32, #tpu.memory_space<vmem>>, vector<4x256xf32>,
    %c0_10 = arith.constant 0 : index
    %c0_11 = arith.constant 0 : index
    %24 = vector.load %arg7[%c0_10, %c0_11] : memref<4x290xf32, #tpu.memory_space<vmem>>, vector<4x256xf32>
    %c-1_i32 = arith.constant -1 : i32
    %25 = vector.broadcast %c-1_i32 : i32 to vector<1x256xi32>
    %26 = arith.addi %16, %25 : vector<1x256xi32>
    %c0_i32_12 = arith.constant 0 : i32
    %27 = vector.broadcast %c0_i32_12 : i32 to vector<1x256xi32>
    %28 = arith.cmpi sge, %26, %27 : vector<1x256xi32>
    %c-1_i32_13 = arith.constant -1 : i32
    %29 = vector.broadcast %c-1_i32_13 : i32 to vector<1x256xi32>
    %30 = arith.addi %16, %29 : vector<1x256xi32>
    %c16_i32_14 = arith.constant 16 : i32
    %31 = vector.broadcast %c16_i32_14 : i32 to vector<1x256xi32>
    %32 = arith.cmpi slt, %30, %31 : vector<1x256xi32>
    %33 = arith.andi %28, %32 : vector<1x256xi1>
    %c0_i32_15 = arith.constant 0 : i32
    %34 = arith.sitofp %c0_i32_15 : i32 to f32
    %35 = vector.shape_cast %33 : vector<1x256xi1> to vector<1x256xi1>
    %36 = vector.broadcast %35 : vector<1x256xi1> to vector<4x256xi1>
    %37 = vector.broadcast %34 : f32 to vector<4x256xf32>
    %38 = arith.select %36, %24, %37 : vector<4x256xi1>, vector<4x256xf32>
    %c0_16 = arith.constant 0 : index
    %c0_17 = arith.constant 0 : index
    %39 = vector.load %arg9[%c0_16, %c0_17] : memref<36x256xf32, #tpu.memory_space<vmem>>, vector<4x256xf32>
    tpu.vector_store %arg9[%c0_16, %c0_17], %38 {strides = array<i32>} : memref<36x256xf32, #tpu.memory_space<vmem>>, vector<4x256xf32>,
    %c0_18 = arith.constant 0 : index
    %c1 = arith.constant 1 : index
    %40 = vector.load %arg7[%c0_18, %c1] : memref<4x290xf32, #tpu.memory_space<vmem>>, vector<4x256xf32>
    %c4 = arith.constant 4 : index
    %c0_19 = arith.constant 0 : index
    %41 = vector.load %arg9[%c4, %c0_19] : memref<36x256xf32, #tpu.memory_space<vmem>>, vector<4x256xf32>
    tpu.vector_store %arg9[%c4, %c0_19], %40 {strides = array<i32>} : memref<36x256xf32, #tpu.memory_space<vmem>>, vector<4x256xf32>,
    %c0_20 = arith.constant 0 : index
    %c2 = arith.constant 2 : index
    %42 = vector.load %arg7[%c0_20, %c2] : memref<4x290xf32, #tpu.memory_space<vmem>>, vector<4x256xf32>
    %c1_i32_21 = arith.constant 1 : i32
    %43 = vector.broadcast %c1_i32_21 : i32 to vector<1x256xi32>
    %44 = arith.addi %16, %43 : vector<1x256xi32>
    %c0_i32_22 = arith.constant 0 : i32
    %45 = vector.broadcast %c0_i32_22 : i32 to vector<1x256xi32>
    %46 = arith.cmpi sge, %44, %45 : vector<1x256xi32>
    %c1_i32_23 = arith.constant 1 : i32
    %47 = vector.broadcast %c1_i32_23 : i32 to vector<1x256xi32>
    %48 = arith.addi %16, %47 : vector<1x256xi32>
    %c16_i32_24 = arith.constant 16 : i32
    %49 = vector.broadcast %c16_i32_24 : i32 to vector<1x256xi32>
    %50 = arith.cmpi slt, %48, %49 : vector<1x256xi32>
    %51 = arith.andi %46, %50 : vector<1x256xi1>
    %c0_i32_25 = arith.constant 0 : i32
    %52 = arith.sitofp %c0_i32_25 : i32 to f32
    %53 = vector.shape_cast %51 : vector<1x256xi1> to vector<1x256xi1>
    %54 = vector.broadcast %53 : vector<1x256xi1> to vector<4x256xi1>
    %55 = vector.broadcast %52 : f32 to vector<4x256xf32>
    %56 = arith.select %54, %42, %55 : vector<4x256xi1>, vector<4x256xf32>
    %c8 = arith.constant 8 : index
    %c0_26 = arith.constant 0 : index
    %57 = vector.load %arg9[%c8, %c0_26] : memref<36x256xf32, #tpu.memory_space<vmem>>, vector<4x256xf32>
    tpu.vector_store %arg9[%c8, %c0_26], %56 {strides = array<i32>} : memref<36x256xf32, #tpu.memory_space<vmem>>, vector<4x256xf32>,
    %c0_27 = arith.constant 0 : index
    %c16 = arith.constant 16 : index
    %58 = vector.load %arg7[%c0_27, %c16] : memref<4x290xf32, #tpu.memory_space<vmem>>, vector<4x256xf32>
    %c-1_i32_28 = arith.constant -1 : i32
    %59 = vector.broadcast %c-1_i32_28 : i32 to vector<1x256xi32>
    %60 = arith.addi %16, %59 : vector<1x256xi32>
    %c0_i32_29 = arith.constant 0 : i32
    %61 = vector.broadcast %c0_i32_29 : i32 to vector<1x256xi32>
    %62 = arith.cmpi sge, %60, %61 : vector<1x256xi32>
    %c-1_i32_30 = arith.constant -1 : i32
    %63 = vector.broadcast %c-1_i32_30 : i32 to vector<1x256xi32>
    %64 = arith.addi %16, %63 : vector<1x256xi32>
    %c16_i32_31 = arith.constant 16 : i32
    %65 = vector.broadcast %c16_i32_31 : i32 to vector<1x256xi32>
    %66 = arith.cmpi slt, %64, %65 : vector<1x256xi32>
    %67 = arith.andi %62, %66 : vector<1x256xi1>
    %c0_i32_32 = arith.constant 0 : i32
    %68 = arith.sitofp %c0_i32_32 : i32 to f32
    %69 = vector.shape_cast %67 : vector<1x256xi1> to vector<1x256xi1>
    %70 = vector.broadcast %69 : vector<1x256xi1> to vector<4x256xi1>
    %71 = vector.broadcast %68 : f32 to vector<4x256xf32>
    %72 = arith.select %70, %58, %71 : vector<4x256xi1>, vector<4x256xf32>
    %c12 = arith.constant 12 : index
    %c0_33 = arith.constant 0 : index
    %73 = vector.load %arg9[%c12, %c0_33] : memref<36x256xf32, #tpu.memory_space<vmem>>, vector<4x256xf32>
    tpu.vector_store %arg9[%c12, %c0_33], %72 {strides = array<i32>} : memref<36x256xf32, #tpu.memory_space<vmem>>, vector<4x256xf32>,
    %c0_34 = arith.constant 0 : index
    %c17_35 = arith.constant 17 : index
    %74 = vector.load %arg7[%c0_34, %c17_35] : memref<4x290xf32, #tpu.memory_space<vmem>>, vector<4x256xf32>
    %c16_36 = arith.constant 16 : index
    %c0_37 = arith.constant 0 : index
    %75 = vector.load %arg9[%c16_36, %c0_37] : memref<36x256xf32, #tpu.memory_space<vmem>>, vector<4x256xf32>
    tpu.vector_store %arg9[%c16_36, %c0_37], %74 {strides = array<i32>} : memref<36x256xf32, #tpu.memory_space<vmem>>, vector<4x256xf32>,
    %c0_38 = arith.constant 0 : index
    %c18 = arith.constant 18 : index
    %76 = vector.load %arg7[%c0_38, %c18] : memref<4x290xf32, #tpu.memory_space<vmem>>, vector<4x256xf32>
    %c1_i32_39 = arith.constant 1 : i32
    %77 = vector.broadcast %c1_i32_39 : i32 to vector<1x256xi32>
    %78 = arith.addi %16, %77 : vector<1x256xi32>
    %c0_i32_40 = arith.constant 0 : i32
    %79 = vector.broadcast %c0_i32_40 : i32 to vector<1x256xi32>
    %80 = arith.cmpi sge, %78, %79 : vector<1x256xi32>
    %c1_i32_41 = arith.constant 1 : i32
    %81 = vector.broadcast %c1_i32_41 : i32 to vector<1x256xi32>
    %82 = arith.addi %16, %81 : vector<1x256xi32>
    %c16_i32_42 = arith.constant 16 : i32
    %83 = vector.broadcast %c16_i32_42 : i32 to vector<1x256xi32>
    %84 = arith.cmpi slt, %82, %83 : vector<1x256xi32>
    %85 = arith.andi %80, %84 : vector<1x256xi1>
    %c0_i32_43 = arith.constant 0 : i32
    %86 = arith.sitofp %c0_i32_43 : i32 to f32
    %87 = vector.shape_cast %85 : vector<1x256xi1> to vector<1x256xi1>
    %88 = vector.broadcast %87 : vector<1x256xi1> to vector<4x256xi1>
    %89 = vector.broadcast %86 : f32 to vector<4x256xf32>
    %90 = arith.select %88, %76, %89 : vector<4x256xi1>, vector<4x256xf32>
    %c20 = arith.constant 20 : index
    %c0_44 = arith.constant 0 : index
    %91 = vector.load %arg9[%c20, %c0_44] : memref<36x256xf32, #tpu.memory_space<vmem>>, vector<4x256xf32>
    tpu.vector_store %arg9[%c20, %c0_44], %90 {strides = array<i32>} : memref<36x256xf32, #tpu.memory_space<vmem>>, vector<4x256xf32>,
    %c0_45 = arith.constant 0 : index
    %c32 = arith.constant 32 : index
    %92 = vector.load %arg7[%c0_45, %c32] : memref<4x290xf32, #tpu.memory_space<vmem>>, vector<4x256xf32>
    %c-1_i32_46 = arith.constant -1 : i32
    %93 = vector.broadcast %c-1_i32_46 : i32 to vector<1x256xi32>
    %94 = arith.addi %16, %93 : vector<1x256xi32>
    %c0_i32_47 = arith.constant 0 : i32
    %95 = vector.broadcast %c0_i32_47 : i32 to vector<1x256xi32>
    %96 = arith.cmpi sge, %94, %95 : vector<1x256xi32>
    %c-1_i32_48 = arith.constant -1 : i32
    %97 = vector.broadcast %c-1_i32_48 : i32 to vector<1x256xi32>
    %98 = arith.addi %16, %97 : vector<1x256xi32>
    %c16_i32_49 = arith.constant 16 : i32
    %99 = vector.broadcast %c16_i32_49 : i32 to vector<1x256xi32>
    %100 = arith.cmpi slt, %98, %99 : vector<1x256xi32>
    %101 = arith.andi %96, %100 : vector<1x256xi1>
    %c0_i32_50 = arith.constant 0 : i32
    %102 = arith.sitofp %c0_i32_50 : i32 to f32
    %103 = vector.shape_cast %101 : vector<1x256xi1> to vector<1x256xi1>
    %104 = vector.broadcast %103 : vector<1x256xi1> to vector<4x256xi1>
    %105 = vector.broadcast %102 : f32 to vector<4x256xf32>
    %106 = arith.select %104, %92, %105 : vector<4x256xi1>, vector<4x256xf32>
    %c24 = arith.constant 24 : index
    %c0_51 = arith.constant 0 : index
    %107 = vector.load %arg9[%c24, %c0_51] : memref<36x256xf32, #tpu.memory_space<vmem>>, vector<4x256xf32>
    tpu.vector_store %arg9[%c24, %c0_51], %106 {strides = array<i32>} : memref<36x256xf32, #tpu.memory_space<vmem>>, vector<4x256xf32>,
    %c0_52 = arith.constant 0 : index
    %c33 = arith.constant 33 : index
    %108 = vector.load %arg7[%c0_52, %c33] : memref<4x290xf32, #tpu.memory_space<vmem>>, vector<4x256xf32>
    %c28 = arith.constant 28 : index
    %c0_53 = arith.constant 0 : index
    %109 = vector.load %arg9[%c28, %c0_53] : memref<36x256xf32, #tpu.memory_space<vmem>>, vector<4x256xf32>
    tpu.vector_store %arg9[%c28, %c0_53], %108 {strides = array<i32>} : memref<36x256xf32, #tpu.memory_space<vmem>>, vector<4x256xf32>,
    %c0_54 = arith.constant 0 : index
    %c34 = arith.constant 34 : index
    %110 = vector.load %arg7[%c0_54, %c34] : memref<4x290xf32, #tpu.memory_space<vmem>>, vector<4x256xf32>
    %c1_i32_55 = arith.constant 1 : i32
    %111 = vector.broadcast %c1_i32_55 : i32 to vector<1x256xi32>
    %112 = arith.addi %16, %111 : vector<1x256xi32>
    %c0_i32_56 = arith.constant 0 : i32
    %113 = vector.broadcast %c0_i32_56 : i32 to vector<1x256xi32>
    %114 = arith.cmpi sge, %112, %113 : vector<1x256xi32>
    %c1_i32_57 = arith.constant 1 : i32
    %115 = vector.broadcast %c1_i32_57 : i32 to vector<1x256xi32>
    %116 = arith.addi %16, %115 : vector<1x256xi32>
    %c16_i32_58 = arith.constant 16 : i32
    %117 = vector.broadcast %c16_i32_58 : i32 to vector<1x256xi32>
    %118 = arith.cmpi slt, %116, %117 : vector<1x256xi32>
    %119 = arith.andi %114, %118 : vector<1x256xi1>
    %c0_i32_59 = arith.constant 0 : i32
    %120 = arith.sitofp %c0_i32_59 : i32 to f32
    %121 = vector.shape_cast %119 : vector<1x256xi1> to vector<1x256xi1>
    %122 = vector.broadcast %121 : vector<1x256xi1> to vector<4x256xi1>
    %123 = vector.broadcast %120 : f32 to vector<4x256xf32>
    %124 = arith.select %122, %110, %123 : vector<4x256xi1>, vector<4x256xf32>
    %c32_60 = arith.constant 32 : index
    %c0_61 = arith.constant 0 : index
    %125 = vector.load %arg9[%c32_60, %c0_61] : memref<36x256xf32, #tpu.memory_space<vmem>>, vector<4x256xf32>
    tpu.vector_store %arg9[%c32_60, %c0_61], %124 {strides = array<i32>} : memref<36x256xf32, #tpu.memory_space<vmem>>, vector<4x256xf32>,
    %c0_62 = arith.constant 0 : index
    %c0_63 = arith.constant 0 : index
    %126 = vector.load %arg2[%c0_62, %c0_63] : memref<4x36xf32, #tpu.memory_space<vmem>>, vector<4x36xf32>
    %c0_64 = arith.constant 0 : index
    %c0_65 = arith.constant 0 : index
    %127 = vector.load %arg9[%c0_64, %c0_65] : memref<36x256xf32, #tpu.memory_space<vmem>>, vector<36x256xf32>
    %cst_66 = arith.constant dense<0.000000e+00> : vector<4x256xf32>
    %128 = tpu.matmul %126, %127, %cst_66 {dimension_numbers = #tpu.dot_dimension_numbers<[1], [0], [0], [1], [0, 0, 1, 1], [], []>} : vector<4x36xf32>, vector<36x256xf32>, vector<4x256xf32> -> vector<4x256xf32>
    %c0_67 = arith.constant 0 : index
    %c0_68 = arith.constant 0 : index
    %129 = vector.load %arg3[%c0_67, %c0_68] : memref<4x1xf32, #tpu.memory_space<vmem>>, vector<4x1xf32>
    %130 = vector.broadcast %129 : vector<4x1xf32> to vector<4x256xf32>
    %131 = arith.addf %128, %130 : vector<4x256xf32>
    %cst_69 = arith.constant 0.000000e+00 : f32
    %132 = vector.broadcast %cst_69 : f32 to vector<4x256xf32>
    %133 = arith.cmpf ogt, %131, %132 : vector<4x256xf32>
    %cst_70 = arith.constant 1.000000e-01 : f32
    %134 = vector.broadcast %cst_70 : f32 to vector<4x256xf32>
    %135 = arith.mulf %134, %131 : vector<4x256xf32>
    %136 = arith.select %133, %131, %135 : vector<4x256xi1>, vector<4x256xf32>
    %cst_71 = arith.constant 0.000000e+00 : f32
    %137 = vector.broadcast %cst_71 : f32 to vector<4x34xf32>
    %c0_72 = arith.constant 0 : index
    %c0_73 = arith.constant 0 : index
    %138 = vector.load %arg8[%c0_72, %c0_73] : memref<4x324xf32, #tpu.memory_space<vmem>>, vector<4x34xf32>
    tpu.vector_store %arg8[%c0_72, %c0_73], %137 {strides = array<i32>} : memref<4x324xf32, #tpu.memory_space<vmem>>, vector<4x34xf32>,
    %cst_74 = arith.constant 0.000000e+00 : f32
    %139 = vector.broadcast %cst_74 : f32 to vector<4x34xf32>
    %c0_75 = arith.constant 0 : index
    %c290 = arith.constant 290 : index
    %140 = vector.load %arg8[%c0_75, %c290] : memref<4x324xf32, #tpu.memory_space<vmem>>, vector<4x34xf32>
    tpu.vector_store %arg8[%c0_75, %c290], %139 {strides = array<i32>} : memref<4x324xf32, #tpu.memory_space<vmem>>, vector<4x34xf32>,
    %c0_76 = arith.constant 0 : index
    %c34_77 = arith.constant 34 : index
    %141 = vector.load %arg8[%c0_76, %c34_77] : memref<4x324xf32, #tpu.memory_space<vmem>>, vector<4x256xf32>
    tpu.vector_store %arg8[%c0_76, %c34_77], %136 {strides = array<i32>} : memref<4x324xf32, #tpu.memory_space<vmem>>, vector<4x256xf32>,
    %c0_78 = arith.constant 0 : index
    %c0_79 = arith.constant 0 : index
    %142 = vector.load %arg8[%c0_78, %c0_79] : memref<4x324xf32, #tpu.memory_space<vmem>>, vector<4x256xf32>
    %c-2_i32 = arith.constant -2 : i32
    %143 = vector.broadcast %c-2_i32 : i32 to vector<1x256xi32>
    %144 = arith.addi %16, %143 : vector<1x256xi32>
    %c0_i32_80 = arith.constant 0 : i32
    %145 = vector.broadcast %c0_i32_80 : i32 to vector<1x256xi32>
    %146 = arith.cmpi sge, %144, %145 : vector<1x256xi32>
    %c-2_i32_81 = arith.constant -2 : i32
    %147 = vector.broadcast %c-2_i32_81 : i32 to vector<1x256xi32>
    %148 = arith.addi %16, %147 : vector<1x256xi32>
    %c16_i32_82 = arith.constant 16 : i32
    %149 = vector.broadcast %c16_i32_82 : i32 to vector<1x256xi32>
    %150 = arith.cmpi slt, %148, %149 : vector<1x256xi32>
    %151 = arith.andi %146, %150 : vector<1x256xi1>
    %c0_i32_83 = arith.constant 0 : i32
    %152 = arith.sitofp %c0_i32_83 : i32 to f32
    %153 = vector.shape_cast %151 : vector<1x256xi1> to vector<1x256xi1>
    %154 = vector.broadcast %153 : vector<1x256xi1> to vector<4x256xi1>
    %155 = vector.broadcast %152 : f32 to vector<4x256xf32>
    %156 = arith.select %154, %142, %155 : vector<4x256xi1>, vector<4x256xf32>
    %c0_84 = arith.constant 0 : index
    %c0_85 = arith.constant 0 : index
    %157 = vector.load %arg9[%c0_84, %c0_85] : memref<36x256xf32, #tpu.memory_space<vmem>>, vector<4x256xf32>
    tpu.vector_store %arg9[%c0_84, %c0_85], %156 {strides = array<i32>} : memref<36x256xf32, #tpu.memory_space<vmem>>, vector<4x256xf32>,
    %c0_86 = arith.constant 0 : index
    %c2_87 = arith.constant 2 : index
    %158 = vector.load %arg8[%c0_86, %c2_87] : memref<4x324xf32, #tpu.memory_space<vmem>>, vector<4x256xf32>
    %c4_88 = arith.constant 4 : index
    %c0_89 = arith.constant 0 : index
    %159 = vector.load %arg9[%c4_88, %c0_89] : memref<36x256xf32, #tpu.memory_space<vmem>>, vector<4x256xf32>
    tpu.vector_store %arg9[%c4_88, %c0_89], %158 {strides = array<i32>} : memref<36x256xf32, #tpu.memory_space<vmem>>, vector<4x256xf32>,
    %c0_90 = arith.constant 0 : index
    %c4_91 = arith.constant 4 : index
    %160 = vector.load %arg8[%c0_90, %c4_91] : memref<4x324xf32, #tpu.memory_space<vmem>>, vector<4x256xf32>
    %c2_i32 = arith.constant 2 : i32
    %161 = vector.broadcast %c2_i32 : i32 to vector<1x256xi32>
    %162 = arith.addi %16, %161 : vector<1x256xi32>
    %c0_i32_92 = arith.constant 0 : i32
    %163 = vector.broadcast %c0_i32_92 : i32 to vector<1x256xi32>
    %164 = arith.cmpi sge, %162, %163 : vector<1x256xi32>
    %c2_i32_93 = arith.constant 2 : i32
    %165 = vector.broadcast %c2_i32_93 : i32 to vector<1x256xi32>
    %166 = arith.addi %16, %165 : vector<1x256xi32>
    %c16_i32_94 = arith.constant 16 : i32
    %167 = vector.broadcast %c16_i32_94 : i32 to vector<1x256xi32>
    %168 = arith.cmpi slt, %166, %167 : vector<1x256xi32>
    %169 = arith.andi %164, %168 : vector<1x256xi1>
    %c0_i32_95 = arith.constant 0 : i32
    %170 = arith.sitofp %c0_i32_95 : i32 to f32
    %171 = vector.shape_cast %169 : vector<1x256xi1> to vector<1x256xi1>
    %172 = vector.broadcast %171 : vector<1x256xi1> to vector<4x256xi1>
    %173 = vector.broadcast %170 : f32 to vector<4x256xf32>
    %174 = arith.select %172, %160, %173 : vector<4x256xi1>, vector<4x256xf32>
    %c8_96 = arith.constant 8 : index
    %c0_97 = arith.constant 0 : index
    %175 = vector.load %arg9[%c8_96, %c0_97] : memref<36x256xf32, #tpu.memory_space<vmem>>, vector<4x256xf32>
    tpu.vector_store %arg9[%c8_96, %c0_97], %174 {strides = array<i32>} : memref<36x256xf32, #tpu.memory_space<vmem>>, vector<4x256xf32>,
    %c0_98 = arith.constant 0 : index
    %c32_99 = arith.constant 32 : index
    %176 = vector.load %arg8[%c0_98, %c32_99] : memref<4x324xf32, #tpu.memory_space<vmem>>, vector<4x256xf32>
    %c-2_i32_100 = arith.constant -2 : i32
    %177 = vector.broadcast %c-2_i32_100 : i32 to vector<1x256xi32>
    %178 = arith.addi %16, %177 : vector<1x256xi32>
    %c0_i32_101 = arith.constant 0 : i32
    %179 = vector.broadcast %c0_i32_101 : i32 to vector<1x256xi32>
    %180 = arith.cmpi sge, %178, %179 : vector<1x256xi32>
    %c-2_i32_102 = arith.constant -2 : i32
    %181 = vector.broadcast %c-2_i32_102 : i32 to vector<1x256xi32>
    %182 = arith.addi %16, %181 : vector<1x256xi32>
    %c16_i32_103 = arith.constant 16 : i32
    %183 = vector.broadcast %c16_i32_103 : i32 to vector<1x256xi32>
    %184 = arith.cmpi slt, %182, %183 : vector<1x256xi32>
    %185 = arith.andi %180, %184 : vector<1x256xi1>
    %c0_i32_104 = arith.constant 0 : i32
    %186 = arith.sitofp %c0_i32_104 : i32 to f32
    %187 = vector.shape_cast %185 : vector<1x256xi1> to vector<1x256xi1>
    %188 = vector.broadcast %187 : vector<1x256xi1> to vector<4x256xi1>
    %189 = vector.broadcast %186 : f32 to vector<4x256xf32>
    %190 = arith.select %188, %176, %189 : vector<4x256xi1>, vector<4x256xf32>
    %c12_105 = arith.constant 12 : index
    %c0_106 = arith.constant 0 : index
    %191 = vector.load %arg9[%c12_105, %c0_106] : memref<36x256xf32, #tpu.memory_space<vmem>>, vector<4x256xf32>
    tpu.vector_store %arg9[%c12_105, %c0_106], %190 {strides = array<i32>} : memref<36x256xf32, #tpu.memory_space<vmem>>, vector<4x256xf32>,
    %c0_107 = arith.constant 0 : index
    %c34_108 = arith.constant 34 : index
    %192 = vector.load %arg8[%c0_107, %c34_108] : memref<4x324xf32, #tpu.memory_space<vmem>>, vector<4x256xf32>
    %c16_109 = arith.constant 16 : index
    %c0_110 = arith.constant 0 : index
    %193 = vector.load %arg9[%c16_109, %c0_110] : memref<36x256xf32, #tpu.memory_space<vmem>>, vector<4x256xf32>
    tpu.vector_store %arg9[%c16_109, %c0_110], %192 {strides = array<i32>} : memref<36x256xf32, #tpu.memory_space<vmem>>, vector<4x256xf32>,
    %c0_111 = arith.constant 0 : index
    %c36 = arith.constant 36 : index
    %194 = vector.load %arg8[%c0_111, %c36] : memref<4x324xf32, #tpu.memory_space<vmem>>, vector<4x256xf32>
    %c2_i32_112 = arith.constant 2 : i32
    %195 = vector.broadcast %c2_i32_112 : i32 to vector<1x256xi32>
    %196 = arith.addi %16, %195 : vector<1x256xi32>
    %c0_i32_113 = arith.constant 0 : i32
    %197 = vector.broadcast %c0_i32_113 : i32 to vector<1x256xi32>
    %198 = arith.cmpi sge, %196, %197 : vector<1x256xi32>
    %c2_i32_114 = arith.constant 2 : i32
    %199 = vector.broadcast %c2_i32_114 : i32 to vector<1x256xi32>
    %200 = arith.addi %16, %199 : vector<1x256xi32>
    %c16_i32_115 = arith.constant 16 : i32
    %201 = vector.broadcast %c16_i32_115 : i32 to vector<1x256xi32>
    %202 = arith.cmpi slt, %200, %201 : vector<1x256xi32>
    %203 = arith.andi %198, %202 : vector<1x256xi1>
    %c0_i32_116 = arith.constant 0 : i32
    %204 = arith.sitofp %c0_i32_116 : i32 to f32
    %205 = vector.shape_cast %203 : vector<1x256xi1> to vector<1x256xi1>
    %206 = vector.broadcast %205 : vector<1x256xi1> to vector<4x256xi1>
    %207 = vector.broadcast %204 : f32 to vector<4x256xf32>
    %208 = arith.select %206, %194, %207 : vector<4x256xi1>, vector<4x256xf32>
    %c20_117 = arith.constant 20 : index
    %c0_118 = arith.constant 0 : index
    %209 = vector.load %arg9[%c20_117, %c0_118] : memref<36x256xf32, #tpu.memory_space<vmem>>, vector<4x256xf32>
    tpu.vector_store %arg9[%c20_117, %c0_118], %208 {strides = array<i32>} : memref<36x256xf32, #tpu.memory_space<vmem>>, vector<4x256xf32>,
    %c0_119 = arith.constant 0 : index
    %c64 = arith.constant 64 : index
    %210 = vector.load %arg8[%c0_119, %c64] : memref<4x324xf32, #tpu.memory_space<vmem>>, vector<4x256xf32>
    %c-2_i32_120 = arith.constant -2 : i32
    %211 = vector.broadcast %c-2_i32_120 : i32 to vector<1x256xi32>
    %212 = arith.addi %16, %211 : vector<1x256xi32>
    %c0_i32_121 = arith.constant 0 : i32
    %213 = vector.broadcast %c0_i32_121 : i32 to vector<1x256xi32>
    %214 = arith.cmpi sge, %212, %213 : vector<1x256xi32>
    %c-2_i32_122 = arith.constant -2 : i32
    %215 = vector.broadcast %c-2_i32_122 : i32 to vector<1x256xi32>
    %216 = arith.addi %16, %215 : vector<1x256xi32>
    %c16_i32_123 = arith.constant 16 : i32
    %217 = vector.broadcast %c16_i32_123 : i32 to vector<1x256xi32>
    %218 = arith.cmpi slt, %216, %217 : vector<1x256xi32>
    %219 = arith.andi %214, %218 : vector<1x256xi1>
    %c0_i32_124 = arith.constant 0 : i32
    %220 = arith.sitofp %c0_i32_124 : i32 to f32
    %221 = vector.shape_cast %219 : vector<1x256xi1> to vector<1x256xi1>
    %222 = vector.broadcast %221 : vector<1x256xi1> to vector<4x256xi1>
    %223 = vector.broadcast %220 : f32 to vector<4x256xf32>
    %224 = arith.select %222, %210, %223 : vector<4x256xi1>, vector<4x256xf32>
    %c24_125 = arith.constant 24 : index
    %c0_126 = arith.constant 0 : index
    %225 = vector.load %arg9[%c24_125, %c0_126] : memref<36x256xf32, #tpu.memory_space<vmem>>, vector<4x256xf32>
    tpu.vector_store %arg9[%c24_125, %c0_126], %224 {strides = array<i32>} : memref<36x256xf32, #tpu.memory_space<vmem>>, vector<4x256xf32>,
    %c0_127 = arith.constant 0 : index
    %c66 = arith.constant 66 : index
    %226 = vector.load %arg8[%c0_127, %c66] : memref<4x324xf32, #tpu.memory_space<vmem>>, vector<4x256xf32>
    %c28_128 = arith.constant 28 : index
    %c0_129 = arith.constant 0 : index
    %227 = vector.load %arg9[%c28_128, %c0_129] : memref<36x256xf32, #tpu.memory_space<vmem>>, vector<4x256xf32>
    tpu.vector_store %arg9[%c28_128, %c0_129], %226 {strides = array<i32>} : memref<36x256xf32, #tpu.memory_space<vmem>>, vector<4x256xf32>,
    %c0_130 = arith.constant 0 : index
    %c68 = arith.constant 68 : index
    %228 = vector.load %arg8[%c0_130, %c68] : memref<4x324xf32, #tpu.memory_space<vmem>>, vector<4x256xf32>
    %c2_i32_131 = arith.constant 2 : i32
    %229 = vector.broadcast %c2_i32_131 : i32 to vector<1x256xi32>
    %230 = arith.addi %16, %229 : vector<1x256xi32>
    %c0_i32_132 = arith.constant 0 : i32
    %231 = vector.broadcast %c0_i32_132 : i32 to vector<1x256xi32>
    %232 = arith.cmpi sge, %230, %231 : vector<1x256xi32>
    %c2_i32_133 = arith.constant 2 : i32
    %233 = vector.broadcast %c2_i32_133 : i32 to vector<1x256xi32>
    %234 = arith.addi %16, %233 : vector<1x256xi32>
    %c16_i32_134 = arith.constant 16 : i32
    %235 = vector.broadcast %c16_i32_134 : i32 to vector<1x256xi32>
    %236 = arith.cmpi slt, %234, %235 : vector<1x256xi32>
    %237 = arith.andi %232, %236 : vector<1x256xi1>
    %c0_i32_135 = arith.constant 0 : i32
    %238 = arith.sitofp %c0_i32_135 : i32 to f32
    %239 = vector.shape_cast %237 : vector<1x256xi1> to vector<1x256xi1>
    %240 = vector.broadcast %239 : vector<1x256xi1> to vector<4x256xi1>
    %241 = vector.broadcast %238 : f32 to vector<4x256xf32>
    %242 = arith.select %240, %228, %241 : vector<4x256xi1>, vector<4x256xf32>
    %c32_136 = arith.constant 32 : index
    %c0_137 = arith.constant 0 : index
    %243 = vector.load %arg9[%c32_136, %c0_137] : memref<36x256xf32, #tpu.memory_space<vmem>>, vector<4x256xf32>
    tpu.vector_store %arg9[%c32_136, %c0_137], %242 {strides = array<i32>} : memref<36x256xf32, #tpu.memory_space<vmem>>, vector<4x256xf32>,
    %c0_138 = arith.constant 0 : index
    %c0_139 = arith.constant 0 : index
    %244 = vector.load %arg4[%c0_138, %c0_139] : memref<4x36xf32, #tpu.memory_space<vmem>>, vector<4x36xf32>
    %c0_140 = arith.constant 0 : index
    %c0_141 = arith.constant 0 : index
    %245 = vector.load %arg9[%c0_140, %c0_141] : memref<36x256xf32, #tpu.memory_space<vmem>>, vector<36x256xf32>
    %cst_142 = arith.constant dense<0.000000e+00> : vector<4x256xf32>
    %246 = tpu.matmul %244, %245, %cst_142 {dimension_numbers = #tpu.dot_dimension_numbers<[1], [0], [0], [1], [0, 0, 1, 1], [], []>} : vector<4x36xf32>, vector<36x256xf32>, vector<4x256xf32> -> vector<4x256xf32>
    %c0_143 = arith.constant 0 : index
    %c0_144 = arith.constant 0 : index
    %247 = vector.load %arg5[%c0_143, %c0_144] : memref<4x1xf32, #tpu.memory_space<vmem>>, vector<4x1xf32>
    %248 = vector.broadcast %247 : vector<4x1xf32> to vector<4x256xf32>
    %249 = arith.addf %246, %248 : vector<4x256xf32>
    %c0_145 = arith.constant 0 : index
    %c0_146 = arith.constant 0 : index
    %c0_147 = arith.constant 0 : index
    %250 = vector.load %arg1[%c0_145, %c0_146, %c0_147] : memref<1x4x256xf32, #tpu.memory_space<vmem>>, vector<1x4x256xf32>
    %251 = vector.shape_cast %250 : vector<1x4x256xf32> to vector<4x256xf32>
    %252 = arith.addf %249, %251 : vector<4x256xf32>
    %c0_148 = arith.constant 0 : index
    %c0_149 = arith.constant 0 : index
    %c0_150 = arith.constant 0 : index
    %253 = vector.load %arg6[%c0_148, %c0_149, %c0_150] : memref<1x4x256xf32, #tpu.memory_space<vmem>>, vector<1x4x256xf32>
    %254 = vector.shape_cast %253 : vector<1x4x256xf32> to vector<4x256xf32>
    %255 = vector.shape_cast %252 : vector<4x256xf32> to vector<1x4x256xf32>
    tpu.vector_store %arg6[%c0_148, %c0_149, %c0_150], %255 {strides = array<i32>} : memref<1x4x256xf32, #tpu.memory_space<vmem>>, vector<1x4x256xf32>,
    return
  }
  func.func @transform_0(%arg0: i32) -> (i32, i32, i32) {
    %c0_i32 = arith.constant 0 : i32
    %c0_i32_0 = arith.constant 0 : i32
    %c0_i32_1 = arith.constant 0 : i32
    return %arg0, %c0_i32, %c0_i32_0 : i32, i32, i32
  }
  func.func @transform_1(%arg0: i32) -> (i32, i32) {
    %c0_i32 = arith.constant 0 : i32
    %c0_i32_0 = arith.constant 0 : i32
    %c0_i32_1 = arith.constant 0 : i32
    return %c0_i32, %c0_i32_0 : i32, i32
  }
  func.func @transform_2(%arg0: i32) -> (i32, i32) {
    %c0_i32 = arith.constant 0 : i32
    %c0_i32_0 = arith.constant 0 : i32
    %c0_i32_1 = arith.constant 0 : i32
    return %c0_i32, %c0_i32_0 : i32, i32
  }
  func.func @transform_3(%arg0: i32) -> (i32, i32) {
    %c0_i32 = arith.constant 0 : i32
    %c0_i32_0 = arith.constant 0 : i32
    %c0_i32_1 = arith.constant 0 : i32
    return %c0_i32, %c0_i32_0 : i32, i32
  }
  func.func @transform_4(%arg0: i32) -> (i32, i32) {
    %c0_i32 = arith.constant 0 : i32
    %c0_i32_0 = arith.constant 0 : i32
    %c0_i32_1 = arith.constant 0 : i32
    return %c0_i32, %c0_i32_0 : i32, i32
  }
  func.func @transform_5(%arg0: i32) -> (i32, i32, i32) {
    %c0_i32 = arith.constant 0 : i32
    %c0_i32_0 = arith.constant 0 : i32
    %c0_i32_1 = arith.constant 0 : i32
    return %arg0, %c0_i32, %c0_i32_0 : i32, i32, i32
  }
}

</mosaic_0001>

<llo_original>
// kernel: tpu_custom_call.1
$region0: #{tpu_custom_call.1}
  #allocation0 [shape = 'u32[]', space=smem, size = 0x4, offset = 0x4, fixed_abs, tag = 'smem constant byte address 0x4 - core index']
  #allocation1 [shape = 'u32[144,128]{1,0:T(1,128)}', space=vmem, size = 0x12000, scoped, tag = 'internal scratch']
  #allocation2 [shape = 'f32[4,290]{1,0:T(4,128)}', space=vmem, size = 0x1800, scoped, tag = 'scratch operand']
  #allocation3 [shape = 'f32[4,324]{1,0:T(4,128)}', space=vmem, size = 0x1800, scoped, tag = 'scratch operand']
  #allocation4 [shape = 'f32[36,256]{1,0:T(8,128)}', space=vmem, size = 0xa000, scoped, tag = 'scratch operand']
  %s0 = inlined_call_operand.hbm [shape: f32[2,4,256], index: 0, kind: input, shape index: {}]
  %s1 = inlined_call_operand.vmem [shape: f32[4,36], index: 1, kind: input, shape index: {}]
  %s2 = inlined_call_operand.vmem [shape: f32[4,1], index: 2, kind: input, shape index: {}]
  %s3 = inlined_call_operand.vmem [shape: f32[4,36], index: 3, kind: input, shape index: {}]
  %s4 = inlined_call_operand.vmem [shape: f32[4,1], index: 4, kind: input, shape index: {}]
  %s5 = inlined_call_operand.hbm [shape: f32[2,4,256], index: 5, kind: output, shape index: {}]
  %s6 = sld [smem:[#allocation0]]
  $region57: #{tpu_custom_call.1} parent=0
    _
  %s8 = ssub.s32 1, %s6
  %s9 = scalar_select 0, %s8, %s6
  $region1: #{tpu_custom_call.1} parent=0
    #allocation5 [shape = 'u8[8192]{0}', space=vmem, size = 0x2000, scoped, tag = 'input window, operand 0']
    #allocation6 [shape = 's32[2]{0}', space=sflag, size = 0x8, scoped, tag = 'scoped memory for tpu_custom_call.1']
    #allocation7 [shape = 's32[2]{0}', space=sflag, size = 0x8, scoped, tag = 'scoped memory for tpu_custom_call.1']
    #allocation8 [shape = 'u8[8192]{0}', space=vmem, size = 0x2000, scoped, tag = 'output window, operand 0']
    %10 = vsyncpa [#allocation6], 0
    %s11 = scalar_lea.sflag [#allocation6], 1
    %12 = vsyncpa %s11, 0
    %13 = vsyncpa [#allocation7], 0
    %s14 = scalar_lea.sflag [#allocation7], 1
    %15 = vsyncpa %s14, 0
    loop: start=0, step=1, limit=4
    $region2: #{tpu_custom_call.1} parent=1 // loop_pre_header
      _
    $region3: #{tpu_custom_call.1} parent=1 // loop_header
      %s17 = sphi 0, %s21
      %p18 = scmp.ge.s32.totalorder %s17, 4
      %s27 = sphi 0, %s29
      %s30 = sphi 0, %s27
      %s31 = sphi 0, %s30
      %s47 = sphi 0, %s31
      %s51 = sphi 0, %s51
      %s53 = sphi 0, %s51
      %s54 = sphi 0, %s53
      %s68 = sphi 0, %s54
      %s72 = sphi 0, %s72
      %s74 = sphi 0, %s72
      %s75 = sphi 0, %s74
      %s89 = sphi 0, %s75
      %s93 = sphi 0, %s93
      %s95 = sphi 0, %s93
      %s96 = sphi 0, %s95
      %s110 = sphi 0, %s96
      %s114 = sphi 0, %s114
      %s116 = sphi 0, %s114
      %s117 = sphi 0, %s116
      %s131 = sphi 0, %s117
      %s137 = sphi 0, %s139
      %s140 = sphi 0, %s137
      %s141 = sphi 0, %s140
      %s157 = sphi 0, %s141
    $region4: #{tpu_custom_call.1} parent=1 // loop_header_branch
      %20 = sbr.rel (%p18) target = $region8
    $region5: #{tpu_custom_call.1} parent=1 // loop_body
      %s22 = ssub.s32 %s17, 1
      %s23 = ssub.s32 %s17, 2
      %s24 = sadd.s32 %s17, 1
      %s25 = ssub.s32 %s17, %s24
      %p26 = scmp.eq.s32.totalorder %s25, 0
      %s28 = sadd.s32 %s27, 1
      %s29 = scalar_select %p26, %s27, %s28
      %p32 = pneg %p26
      %p33 = scmp.eq.s32.totalorder %s17, 1
      %p34 = por %p32, %p33
      %p35 = scmp.ne.s32.totalorder %s27, %s30
      %p36 = scmp.eq.s32.totalorder %s17, 0
      %p37 = por %p35, %p36
      %p38 = scmp.ne.s32.totalorder %s27, %s30
      %p39 = scmp.eq.s32.totalorder %s22, 1
      %p40 = por %p38, %p39
      %p41 = scmp.ne.s32.totalorder %s30, %s31
      %p42 = scmp.eq.s32.totalorder %s22, 0
      %p43 = por %p41, %p42
      %p44 = scmp.ne.s32.totalorder %s30, %s31
      %p45 = scmp.eq.s32.totalorder %s23, 1
      %p46 = por %p44, %p45
      %p48 = scmp.ne.s32.totalorder %s31, %s47
      %p49 = scmp.eq.s32.totalorder %s23, 0
      %p50 = por %p48, %p49
      %s52 = sadd.s32 %s51, 1
      %p55 = scmp.eq.s32.totalorder %s17, 1
      %p56 = scmp.ne.s32.totalorder %s51, %s53
      %p57 = scmp.eq.s32.totalorder %s17, 0
      %p58 = por %p56, %p57
      %p59 = scmp.ne.s32.totalorder %s51, %s53
      %p60 = scmp.eq.s32.totalorder %s22, 1
      %p61 = por %p59, %p60
      %p62 = scmp.ne.s32.totalorder %s53, %s54
      %p63 = scmp.eq.s32.totalorder %s22, 0
      %p64 = por %p62, %p63
      %p65 = scmp.ne.s32.totalorder %s53, %s54
      %p66 = scmp.eq.s32.totalorder %s23, 1
      %p67 = por %p65, %p66
      %p69 = scmp.ne.s32.totalorder %s54, %s68
      %p70 = scmp.eq.s32.totalorder %s23, 0
      %p71 = por %p69, %p70
      %s73 = sadd.s32 %s72, 1
      %p76 = scmp.eq.s32.totalorder %s17, 1
      %p77 = scmp.ne.s32.totalorder %s72, %s74
      %p78 = scmp.eq.s32.totalorder %s17, 0
      %p79 = por %p77, %p78
      %p80 = scmp.ne.s32.totalorder %s72, %s74
      %p81 = scmp.eq.s32.totalorder %s22, 1
      %p82 = por %p80, %p81
      %p83 = scmp.ne.s32.totalorder %s74, %s75
      %p84 = scmp.eq.s32.totalorder %s22, 0
      %p85 = por %p83, %p84
      %p86 = scmp.ne.s32.totalorder %s74, %s75
      %p87 = scmp.eq.s32.totalorder %s23, 1
      %p88 = por %p86, %p87
      %p90 = scmp.ne.s32.totalorder %s75, %s89
      %p91 = scmp.eq.s32.totalorder %s23, 0
      %p92 = por %p90, %p91
      %s94 = sadd.s32 %s93, 1
      %p97 = scmp.eq.s32.totalorder %s17, 1
      %p98 = scmp.ne.s32.totalorder %s93, %s95
      %p99 = scmp.eq.s32.totalorder %s17, 0
      %p100 = por %p98, %p99
      %p101 = scmp.ne.s32.totalorder %s93, %s95
      %p102 = scmp.eq.s32.totalorder %s22, 1
      %p103 = por %p101, %p102
      %p104 = scmp.ne.s32.totalorder %s95, %s96
      %p105 = scmp.eq.s32.totalorder %s22, 0
      %p106 = por %p104, %p105
      %p107 = scmp.ne.s32.totalorder %s95, %s96
      %p108 = scmp.eq.s32.totalorder %s23, 1
      %p109 = por %p107, %p108
      %p111 = scmp.ne.s32.totalorder %s96, %s110
      %p112 = scmp.eq.s32.totalorder %s23, 0
      %p113 = por %p111, %p112
      %s115 = sadd.s32 %s114, 1
      %p118 = scmp.eq.s32.totalorder %s17, 1
      %p119 = scmp.ne.s32.totalorder %s114, %s116
      %p120 = scmp.eq.s32.totalorder %s17, 0
      %p121 = por %p119, %p120
      %p122 = scmp.ne.s32.totalorder %s114, %s116
      %p123 = scmp.eq.s32.totalorder %s22, 1
      %p124 = por %p122, %p123
      %p125 = scmp.ne.s32.totalorder %s116, %s117
      %p126 = scmp.eq.s32.totalorder %s22, 0
      %p127 = por %p125, %p126
      %p128 = scmp.ne.s32.totalorder %s116, %s117
      %p129 = scmp.eq.s32.totalorder %s23, 1
      %p130 = por %p128, %p129
      %p132 = scmp.ne.s32.totalorder %s117, %s131
      %p133 = scmp.eq.s32.totalorder %s23, 0
      %p134 = por %p132, %p133
      %s135 = ssub.s32 %s17, %s24
      %p136 = scmp.eq.s32.totalorder %s135, 0
      %s138 = sadd.s32 %s137, 1
      %s139 = scalar_select %p136, %s137, %s138
      %p142 = pneg %p136
      %p143 = scmp.eq.s32.totalorder %s17, 1
      %p144 = por %p142, %p143
      %p145 = scmp.ne.s32.totalorder %s137, %s140
      %p146 = scmp.eq.s32.totalorder %s17, 0
      %p147 = por %p145, %p146
      %p148 = scmp.ne.s32.totalorder %s137, %s140
      %p149 = scmp.eq.s32.totalorder %s22, 1
      %p150 = por %p148, %p149
      %p151 = scmp.ne.s32.totalorder %s140, %s141
      %p152 = scmp.eq.s32.totalorder %s22, 0
      %p153 = por %p151, %p152
      %p154 = scmp.ne.s32.totalorder %s140, %s141
      %p155 = scmp.eq.s32.totalorder %s23, 1
      %p156 = por %p154, %p155
      %p158 = scmp.ne.s32.totalorder %s141, %s157
      %p159 = scmp.eq.s32.totalorder %s23, 0
      %p160 = por %p158, %p159
      %p161 = scmp.le.s32.totalorder 1, %s17
      %p162 = scmp.lt.s32.totalorder %s17, 3
      %p163 = pnand %p161, %p162
      %p164 = pneg %p163
      // Predicated region
      $region9: #{tpu_custom_call.1} parent=5 // pred_check
        _
      $region10: #{tpu_custom_call.1} parent=5 // pred_check_branch
        %166 = sbr.rel (%p163) target = $region12
      $region11: #{tpu_custom_call.1} parent=5 // pred_region
        %s167 = ssub.s32 %s17, 1
        // Predicated region
        $region13: #{tpu_custom_call.1} parent=11 // pred_check
          %p168 = pneg %p64
        $region14: #{tpu_custom_call.1} parent=11 // pred_check_branch
          %170 = sbr.rel (%p168) target = $region16
        $region15: #{tpu_custom_call.1} parent=11 // pred_region
          _
        $region16: #{tpu_custom_call.1} parent=11 // pred_fallthru
          _
        // Predicated region
        $region17: #{tpu_custom_call.1} parent=11 // pred_check
          %p171 = pneg %p85
        $region18: #{tpu_custom_call.1} parent=11 // pred_check_branch
          %173 = sbr.rel (%p171) target = $region20
        $region19: #{tpu_custom_call.1} parent=11 // pred_region
          _
        $region20: #{tpu_custom_call.1} parent=11 // pred_fallthru
          _
        // Predicated region
        $region21: #{tpu_custom_call.1} parent=11 // pred_check
          %p174 = pneg %p106
        $region22: #{tpu_custom_call.1} parent=11 // pred_check_branch
          %176 = sbr.rel (%p174) target = $region24
        $region23: #{tpu_custom_call.1} parent=11 // pred_region
          _
        $region24: #{tpu_custom_call.1} parent=11 // pred_fallthru
          _
        // Predicated region
        $region25: #{tpu_custom_call.1} parent=11 // pred_check
          %p177 = pneg %p127
        $region26: #{tpu_custom_call.1} parent=11 // pred_check_branch
          %179 = sbr.rel (%p177) target = $region28
        $region27: #{tpu_custom_call.1} parent=11 // pred_region
          _
        $region28: #{tpu_custom_call.1} parent=11 // pred_fallthru
          _
      $region12: #{tpu_custom_call.1} parent=5 // pred_fallthru
        _
      %p180 = scmp.lt.s32.totalorder %s17, 2
      // Predicated region
      $region29: #{tpu_custom_call.1} parent=5 // pred_check
        %p181 = pneg %p180
      $region30: #{tpu_custom_call.1} parent=5 // pred_check_branch
        %183 = sbr.rel (%p181) target = $region32
      $region31: #{tpu_custom_call.1} parent=5 // pred_region
        // Predicated region
        $region33: #{tpu_custom_call.1} parent=31 // pred_check
          %p184 = pneg %p37
        $region34: #{tpu_custom_call.1} parent=31 // pred_check_branch
          %186 = sbr.rel (%p184) target = $region36
        $region35: #{tpu_custom_call.1} parent=31 // pred_region
          %s187 = sand.u32 %s27, 1
          %s188 = scalar_lea.sflag [#allocation6], %s187
          %s189 = sand.u32 %s27, 1
          %s190 = smul.addr %s189, 8
          %s191 = scalar_lea.vmem [#allocation5], %s190
          %s193 = ssub.s32 128, 128
          %194 = vsyncadd %s188, %s193
          %s195 = smul.addr %s17, 2
          %s196 = smul.addr %s195, 64
          %s197 = scalar_lea.hbm %s0, %s196
          %s199 = sshll.u32 %s191, 4
          %s200 = int_to_ptr.vmem [resolvable:$true] %s199
          %202 = dma.hbm_to_vmem [thread:$0]  %s197, 128, %s200, %s188
        $region36: #{tpu_custom_call.1} parent=31 // pred_fallthru
          _
      $region32: #{tpu_custom_call.1} parent=5 // pred_fallthru
        _
      %p203 = scmp.le.s32.totalorder 1, %s17
      %p204 = scmp.lt.s32.totalorder %s17, 3
      %p205 = pnand %p203, %p204
      %p206 = pneg %p205
      // Predicated region
      $region37: #{tpu_custom_call.1} parent=5 // pred_check
        _
      $region38: #{tpu_custom_call.1} parent=5 // pred_check_branch
        %208 = sbr.rel (%p205) target = $region40
      $region39: #{tpu_custom_call.1} parent=5 // pred_region
        %s209 = ssub.s32 %s17, 1
        %s210 = sand.u32 %s30, 1
        %s211 = scalar_lea.sflag [#allocation6], %s210
        %s212 = sand.u32 %s30, 1
        %s213 = smul.addr %s212, 8
        %s214 = scalar_lea.vmem [#allocation5], %s213
        // Predicated region
        $region41: #{tpu_custom_call.1} parent=39 // pred_check
          %p215 = pneg %p43
        $region42: #{tpu_custom_call.1} parent=39 // pred_check_branch
          %217 = sbr.rel (%p215) target = $region44
        $region43: #{tpu_custom_call.1} parent=39 // pred_region
          %218 = dma.done %s211, 128
        $region44: #{tpu_custom_call.1} parent=39 // pred_fallthru
          _
        %s219 = sand.u32 %s30, 1
        %s220 = scalar_lea.sflag [#allocation6], %s219
        %s221 = sand.u32 %s30, 1
        %s222 = smul.addr %s221, 8
        %s223 = scalar_lea.vmem [#allocation5], %s222
        %p224 = pneg %p43
        %p225 = pneg %p40
        %p226 = pneg %p64
        %p227 = pneg %p61
        %p228 = pneg %p85
        %p229 = pneg %p82
        %p230 = pneg %p106
        %p231 = pneg %p103
        %p232 = pneg %p127
        %p233 = pneg %p124
        %p234 = pneg %p153
        %p235 = pneg %p150
        %s236 = sand.u32 %s140, 1
        %s237 = scalar_lea.sflag [#allocation7], %s236
        %s238 = sand.u32 %s140, 1
        %s239 = smul.addr %s238, 8
        %s240 = scalar_lea.vmem [#allocation8], %s239
        %v241 = vlaneseq
        %v242 = vand.u32 %v241, 127
        %v243 = vadd.s32 %v242, 128
        %vm244 = vcmp.lt.s32.totalorder %v242, 0
        %v245 = vsub.s32 0, %v242
        %v246 = vsel %vm244, %v245, %v242
        %v247 = vshrl.u32 %v246, 4
        %v248 = vand.u32 %v246, 15
        %v249 = vsub.s32 0, %v248
        %v250 = vsel %vm244, %v249, %v248
        %vm251 = vcmp.lt.s32.totalorder %v243, 0
        %v252 = vsub.s32 0, %v243
        %v253 = vsel %vm251, %v252, %v243
        %v254 = vshrl.u32 %v253, 4
        %v255 = vand.u32 %v253, 15
        %v256 = vsub.s32 0, %v255
        %v257 = vsel %vm251, %v256, %v255
        %vm258 = vcmp.ne.s32.totalorder %v250, 0
        %vm259 = vcmp.ne.s32.totalorder %v257, 0
        %vm260 = vcmp.lt.s32.totalorder %v250, 0
        %vm261 = vcmp.lt.s32.totalorder %v257, 0
        %vm262 = vmand %vm260, %vm258
        %vm263 = vmand %vm261, %vm259
        %v264 = vadd.s32 %v250, 16
        %v265 = vadd.s32 %v257, 16
        %v266 = vsel %vm262, %v264, %v250
        %v267 = vsel %vm263, %v265, %v257
        %v268 = vld [vmem:[%s214] sm:$0xff]
        %vm269 = vcmask 134144
        %270 = vst.msk [vmem:[#allocation2] sm:$0xf] %vm269, 0.0
        %vm271 = vcmask 273544
        %272 = vst.msk [vmem:[#allocation2 + $0x8] sm:$0xf] %vm271, 0.0
        %274 = vrot.lane.b32.xlu0 %v268, 17
        %v275 = vpop.permute.xlu0 %274
        %v276 = vrot.slane %v275, 4
        %vm277 = vcmask 138240
        %v278 = vsel %vm277, %v276, %v275
        %vm281 = vcmask 1043592
        %vm282 = vcmask 1047556
        %vm283 = vmor %vm282, %vm281
        %284 = vst.msk [vmem:[#allocation2] sm:$0xff] %vm283, %v278
        %285 = vst.msk [vmem:[#allocation2 + $0x8] sm:$0xf] %vm269, %v276
        %v286 = vld [vmem:[#allocation2] sm:$0xff]
        %v287 = vadd.s32 %v266, 4294967295
        %v288 = vadd.s32 %v267, 4294967295
        %vm289 = vcmp.ge.s32.totalorder %v287, 0
        %vm290 = vcmp.ge.s32.totalorder %v288, 0
        %vm291 = vcmp.lt.s32.totalorder %v287, 16
        %vm292 = vcmp.lt.s32.totalorder %v288, 16
        %vm293 = vmand %vm289, %vm291
        %vm294 = vmand %vm290, %vm292
        %v295 = vsel %vm293, 1, 0
        %v296 = vsel %vm294, 1, 0
        %vm297 = vcmp.eq.s32.totalorder %v295, 1
        %vm298 = vcmp.eq.s32.totalorder %v296, 1
        %v300 = vcombine.high %v286, %v286
        %v302 = vsel %vm297, %v286, 0.0
        %v303 = vsel %vm298, %v300, 0.0
        %304 = vst [vmem:[#allocation4] sm:$0xf] %v302
        %305 = vst [vmem:[#allocation4 + $0x8] sm:$0xf] %v303
        %v306 = vld [vmem:[#allocation2] sm:$0xff]
        %v307 = vld [vmem:[#allocation2 + $0x8] sm:$0xf]
        %v310 = vcombine.low %v306, %v306
        %v311 = vcombine.low %v307, %v307
        %312 = vrot.lane.b32.xlu0 %v310, 127
        %v313 = vpop.permute.xlu0 %312
        %314 = vrot.lane.b32.xlu0 %v306, 127
        %v315 = vpop.permute.xlu0 %314
        %316 = vrot.lane.b32.xlu0 %v311, 127
        %v317 = vpop.permute.xlu0 %316
        %vm318 = vcmask 1039360
        %v319 = vsel %vm318, %v313, %v315
        %v320 = vsel %vm318, %v315, %v317
        %323 = vst [vmem:[#allocation4] sm:$0xf0] %v319
        %324 = vst [vmem:[#allocation4 + $0x8] sm:$0xf0] %v320
        %v325 = vld [vmem:[#allocation2] sm:$0xff]
        %v326 = vld [vmem:[#allocation2 + $0x8] sm:$0xf]
        %v327 = vadd.s32 %v266, 1
        %v328 = vadd.s32 %v267, 1
        %vm329 = vcmp.ge.s32.totalorder %v327, 0
        %vm330 = vcmp.ge.s32.totalorder %v328, 0
        %vm331 = vcmp.lt.s32.totalorder %v327, 16
        %vm332 = vcmp.lt.s32.totalorder %v328, 16
        %vm333 = vmand %vm329, %vm331
        %vm334 = vmand %vm330, %vm332
        %v335 = vsel %vm333, 1, 0
        %v336 = vsel %vm334, 1, 0
        %vm337 = vcmp.eq.s32.totalorder %v335, 1
        %vm338 = vcmp.eq.s32.totalorder %v336, 1
        %v341 = vcombine.high %v325, %v325
        %342 = vrot.lane.b32.xlu0 %v325, 126
        %v343 = vpop.permute.xlu0 %342
        %344 = vrot.lane.b32.xlu0 %v341, 126
        %v345 = vpop.permute.xlu0 %344
        %346 = vrot.lane.b32.xlu0 %v326, 126
        %v347 = vpop.permute.xlu0 %346
        %vm348 = vcmask 1031168
        %v349 = vsel %vm348, %v343, %v345
        %v350 = vsel %vm348, %v345, %v347
        %v353 = vsel %vm337, %v349, 0.0
        %v354 = vsel %vm338, %v350, 0.0
        %355 = vst [vmem:[#allocation4 + $0x10] sm:$0xf] %v353
        %356 = vst [vmem:[#allocation4 + $0x18] sm:$0xf] %v354
        %v357 = vld [vmem:[#allocation2] sm:$0xff]
        %v358 = vld [vmem:[#allocation2 + $0x8] sm:$0xf]
        %v361 = vcombine.high %v357, %v357
        %362 = vrot.lane.b32.xlu0 %v357, 112
        %v363 = vpop.permute.xlu0 %362
        %364 = vrot.lane.b32.xlu0 %v361, 112
        %v365 = vpop.permute.xlu0 %364
        %366 = vrot.lane.b32.xlu0 %v358, 112
        %v367 = vpop.permute.xlu0 %366
        %vm368 = vcmask 916480
        %v369 = vsel %vm368, %v363, %v365
        %v370 = vsel %vm368, %v365, %v367
        %v373 = vsel %vm297, %v369, 0.0
        %v374 = vsel %vm298, %v370, 0.0
        %v377 = vrot.slane %v373, 4
        %v378 = vrot.slane %v374, 4
        %381 = vst [vmem:[#allocation4 + $0x10] sm:$0xf0] %v377
        %382 = vst [vmem:[#allocation4 + $0x18] sm:$0xf0] %v378
        %v383 = vld [vmem:[#allocation2] sm:$0xff]
        %v384 = vld [vmem:[#allocation2 + $0x8] sm:$0xf]
        %v387 = vcombine.high %v383, %v383
        %388 = vrot.lane.b32.xlu0 %v383, 111
        %v389 = vpop.permute.xlu0 %388
        %390 = vrot.lane.b32.xlu0 %v387, 111
        %v391 = vpop.permute.xlu0 %390
        %392 = vrot.lane.b32.xlu0 %v384, 111
        %v393 = vpop.permute.xlu0 %392
        %vm394 = vcmask 908288
        %v395 = vsel %vm394, %v389, %v391
        %v396 = vsel %vm394, %v391, %v393
        %399 = vst [vmem:[#allocation4 + $0x20] sm:$0xf] %v395
        %400 = vst [vmem:[#allocation4 + $0x28] sm:$0xf] %v396
        %v401 = vld [vmem:[#allocation2] sm:$0xff]
        %v402 = vld [vmem:[#allocation2 + $0x8] sm:$0xf]
        %v405 = vcombine.high %v401, %v401
        %406 = vrot.lane.b32.xlu0 %v401, 110
        %v407 = vpop.permute.xlu0 %406
        %408 = vrot.lane.b32.xlu0 %v405, 110
        %v409 = vpop.permute.xlu0 %408
        %410 = vrot.lane.b32.xlu0 %v402, 110
        %v411 = vpop.permute.xlu0 %410
        %vm412 = vcmask 900096
        %v413 = vsel %vm412, %v407, %v409
        %v414 = vsel %vm412, %v409, %v411
        %v417 = vsel %vm337, %v413, 0.0
        %v418 = vsel %vm338, %v414, 0.0
        %v421 = vrot.slane %v417, 4
        %v422 = vrot.slane %v418, 4
        %425 = vst [vmem:[#allocation4 + $0x20] sm:$0xf0] %v421
        %426 = vst [vmem:[#allocation4 + $0x28] sm:$0xf0] %v422
        %v427 = vld [vmem:[#allocation2] sm:$0xff]
        %v428 = vld [vmem:[#allocation2 + $0x8] sm:$0xf]
        %v431 = vcombine.high %v427, %v427
        %432 = vrot.lane.b32.xlu0 %v427, 96
        %v433 = vpop.permute.xlu0 %432
        %434 = vrot.lane.b32.xlu0 %v431, 96
        %v435 = vpop.permute.xlu0 %434
        %436 = vrot.lane.b32.xlu0 %v428, 96
        %v437 = vpop.permute.xlu0 %436
        %vm438 = vcmask 785408
        %v439 = vsel %vm438, %v433, %v435
        %v440 = vsel %vm438, %v435, %v437
        %v443 = vsel %vm297, %v439, 0.0
        %v444 = vsel %vm298, %v440, 0.0
        %445 = vst [vmem:[#allocation4 + $0x30] sm:$0xf] %v443
        %446 = vst [vmem:[#allocation4 + $0x38] sm:$0xf] %v444
        %v447 = vld [vmem:[#allocation2] sm:$0xff]
        %v448 = vld [vmem:[#allocation2 + $0x8] sm:$0xf]
        %v451 = vcombine.low %v447, %v447
        %v452 = vcombine.low %v448, %v448
        %453 = vrot.lane.b32.xlu0 %v451, 95
        %v454 = vpop.permute.xlu0 %453
        %455 = vrot.lane.b32.xlu0 %v447, 95
        %v456 = vpop.permute.xlu0 %455
        %457 = vrot.lane.b32.xlu0 %v452, 95
        %v458 = vpop.permute.xlu0 %457
        %vm459 = vcmask 777216
        %v460 = vsel %vm459, %v454, %v456
        %v461 = vsel %vm459, %v456, %v458
        %464 = vst [vmem:[#allocation4 + $0x30] sm:$0xf0] %v460
        %465 = vst [vmem:[#allocation4 + $0x38] sm:$0xf0] %v461
        %v466 = vld [vmem:[#allocation2] sm:$0xff]
        %v467 = vld [vmem:[#allocation2 + $0x8] sm:$0xf]
        %v470 = vcombine.high %v466, %v466
        %471 = vrot.lane.b32.xlu0 %v466, 94
        %v472 = vpop.permute.xlu0 %471
        %473 = vrot.lane.b32.xlu0 %v470, 94
        %v474 = vpop.permute.xlu0 %473
        %475 = vrot.lane.b32.xlu0 %v467, 94
        %v476 = vpop.permute.xlu0 %475
        %vm477 = vcmask 769024
        %v478 = vsel %vm477, %v472, %v474
        %v479 = vsel %vm477, %v474, %v476
        %v482 = vsel %vm337, %v478, 0.0
        %v483 = vsel %vm338, %v479, 0.0
        %484 = vst [vmem:[#allocation4 + $0x40] sm:$0xf] %v482
        %485 = vst [vmem:[#allocation4 + $0x48] sm:$0xf] %v483
        %v486 = vld [vmem:[%s1] sm:$0xf]
        %v487 = vld [vmem:[#allocation4] sm:$0xff]
        %v488 = vld [vmem:[#allocation4 + $0x8] sm:$0xff]
        %v489 = vld [vmem:[#allocation4 + $0x10] sm:$0xff]
        %v490 = vld [vmem:[#allocation4 + $0x18] sm:$0xff]
        %v491 = vld [vmem:[#allocation4 + $0x20] sm:$0xff]
        %v492 = vld [vmem:[#allocation4 + $0x28] sm:$0xff]
        %v493 = vld [vmem:[#allocation4 + $0x30] sm:$0xff]
        %v494 = vld [vmem:[#allocation4 + $0x38] sm:$0xff]
        %v495 = vld [vmem:[#allocation4 + $0x40] sm:$0xf]
        %v496 = vld [vmem:[#allocation4 + $0x48] sm:$0xf]
        %v497 = vld [vmem:[%s2] sm:$0xf]
        %499 = vset.pattern.permute.xlu0 0
        %500 = vperm.xlu0 %499, %v497
        %v501 = vpop.permute.xlu0 %500
        %vm503 = vcmask 293888
        %v505 = vsel %vm503, %v486, 0
        %vm507 = vcmask 1043456
        %v509 = vsel %vm507, %v495, 0
        %v512 = vsel %vm507, %v496, 0
        %514 = vmatprep.subr.mxu0 %v488
        %515 = vmatpush1.msra.mxu0 %v487
        %516 = vmatprep.subr.mxu0 %v490
        %517 = vmatpush1.msra.mxu0 %v489
        %518 = vmatprep.subr.mxu0 %v492
        %519 = vmatpush1.msra.mxu0 %v491
        %520 = vmatprep.subr.mxu0 %v494
        %521 = vmatpush1.msra.mxu0 %v493
        %522 = vmatprep.subr.mxu0 %v512
        %523 = vmatpush1.msra.mxu0 %v509
        %524 = vmatprep.subr.mxu0 0.0
        %525 = vmatpush1.msra.mxu0 0.0
        %526 = vmatprep.subr.mxu0 0.0
        %527 = vmatpush1.msra.mxu0 0.0
        %528 = vmatprep.subr.mxu0 0.0
        %529 = vmatpush1.msra.mxu0 0.0
        %530 = vmatprep.subr.mxu0 0.0
        %531 = vmatpush1.msra.mxu0 0.0
        %532 = vmatprep.subr.mxu0 0.0
        %533 = vmatpush1.msra.mxu0 0.0
        %534 = vmatprep.subr.mxu0 0.0
        %535 = vmatpush1.msra.mxu0 0.0
        %536 = vmatprep.subr.mxu0 0.0
        %537 = vmatpush1.msra.mxu0 0.0
        %538 = vmatprep.subr.mxu0 0.0
        %539 = vmatpush1.msra.mxu0 0.0
        %540 = vmatprep.subr.mxu0 0.0
        %541 = vmatpush1.msra.mxu0 0.0
        %542 = vmatprep.subr.mxu0 0.0
        %543 = vmatpush1.msra.mxu0 0.0
        %544 = vmatprep.subr.mxu0 0.0
        %545 = vmatpush1.msra.mxu0 0.0
        %546 = vmatprep.subr.mxu0 0.0
        %547 = vmatpush1.msra.mxu0 0.0
        %548 = vmatprep.subr.mxu0 0.0
        %549 = vmatpush1.msra.mxu0 0.0
        %550 = vmatprep.subr.mxu0 0.0
        %551 = vmatpush1.msra.mxu0 0.0
        %552 = vmatprep.subr.mxu0 0.0
        %553 = vmatpush1.msra.mxu0 0.0
        %554 = vmatprep.subr.mxu0 0.0
        %555 = vmatpush1.msra.mxu0 0.0
        %556 = vmatprep.subr.mxu0 0.0
        %557 = vmatpush1.msra.mxu0 0.0
        %558 = vmatprep.subr.mxu0 0.0
        %559 = vmatpush1.msra.mxu0 0.0
        %560 = vmatprep.subr.mxu0 0.0
        %561 = vmatpush1.msra.mxu0 0.0
        %562 = vmatprep.subr.mxu0 0.0
        %563 = vmatpush1.msra.mxu0 0.0
        %564 = vmatprep.subr.mxu0 0.0
        %565 = vmatpush1.msra.mxu0 0.0
        %566 = vmatprep.subr.mxu0 0.0
        %567 = vmatpush1.msra.mxu0 0.0
        %568 = vmatprep.subr.mxu0 0.0
        %569 = vmatpush1.msra.mxu0 0.0
        %570 = vmatprep.subr.mxu0 0.0
        %571 = vmatpush1.msra.mxu0 0.0
        %572 = vmatprep.subr.mxu0 0.0
        %573 = vmatpush1.msra.mxu0 0.0
        %574 = vmatprep.subr.mxu0 0.0
        %575 = vmatpush1.msra.mxu0 0.0
        %576 = vmatprep.subr.mxu0 0.0
        %577 = vmatpush1.msra.mxu0 0.0
        %578 = vmatprep.mubr.f32.mxu0 0.0
        %579 = vmatmul.mubr.f32.gmra.mrb[0].mxu0 %v505
        %v580 = vpop.f32.mrb[0].mxu0
        %v581 = vadd.f32 %v501, %v580
        %v582 = vpop.f32.mrb[0].mxu0
        %v583 = vadd.f32 %v501, %v582
        %584 = vdwg.mxu0
        %vm585 = vcmp.gt.f32.partialorder %v581, 0.0
        %vm586 = vcmp.gt.f32.partialorder %v583, 0.0
        %v587 = vmul.f32 %v581, 0.1
        %v588 = vmul.f32 %v583, 0.1
        %v589 = vsel %vm585, %v581, %v587
        %v590 = vsel %vm586, %v583, %v588
        %vm591 = vcmask 273408
        %592 = vst.msk [vmem:[#allocation3] sm:$0xf] %vm591, 0.0
        %vm593 = vcmask 552208
        %594 = vst.msk [vmem:[#allocation3 + $0x8] sm:$0xf] %vm593, 0.0
        %v597 = vcombine.low %v589, %v590
        %598 = vrot.lane.b32.xlu0 %v597, 34
        %v599 = vpop.permute.xlu0 %598
        %v600 = vrot.slane %v599, 4
        %vm601 = vcmask 277504
        %v602 = vsel %vm601, %v600, %v599
        %vm605 = vcmask 1043728
        %vm606 = vmor %vm282, %vm605
        %607 = vst.msk [vmem:[#allocation3] sm:$0xff] %vm606, %v602
        %608 = vst.msk [vmem:[#allocation3 + $0x8] sm:$0xf] %vm591, %v600
        %v609 = vld [vmem:[#allocation3] sm:$0xff]
        %v610 = vadd.s32 %v266, 4294967294
        %v611 = vadd.s32 %v267, 4294967294
        %vm612 = vcmp.ge.s32.totalorder %v610, 0
        %vm613 = vcmp.ge.s32.totalorder %v611, 0
        %vm614 = vcmp.lt.s32.totalorder %v610, 16
        %vm615 = vcmp.lt.s32.totalorder %v611, 16
        %vm616 = vmand %vm612, %vm614
        %vm617 = vmand %vm613, %vm615
        %v618 = vsel %vm616, 1, 0
        %v619 = vsel %vm617, 1, 0
        %vm620 = vcmp.eq.s32.totalorder %v618, 1
        %vm621 = vcmp.eq.s32.totalorder %v619, 1
        %v623 = vcombine.high %v609, %v609
        %v625 = vsel %vm620, %v609, 0.0
        %v626 = vsel %vm621, %v623, 0.0
        %627 = vst [vmem:[#allocation4] sm:$0xf] %v625
        %628 = vst [vmem:[#allocation4 + $0x8] sm:$0xf] %v626
        %v629 = vld [vmem:[#allocation3] sm:$0xff]
        %v630 = vld [vmem:[#allocation3 + $0x8] sm:$0xf]
        %v633 = vcombine.low %v629, %v629
        %v634 = vcombine.low %v630, %v630
        %635 = vrot.lane.b32.xlu0 %v633, 126
        %v636 = vpop.permute.xlu0 %635
        %637 = vrot.lane.b32.xlu0 %v629, 126
        %v638 = vpop.permute.xlu0 %637
        %639 = vrot.lane.b32.xlu0 %v634, 126
        %v640 = vpop.permute.xlu0 %639
        %v641 = vsel %vm348, %v636, %v638
        %v642 = vsel %vm348, %v638, %v640
        %645 = vst [vmem:[#allocation4] sm:$0xf0] %v641
        %646 = vst [vmem:[#allocation4 + $0x8] sm:$0xf0] %v642
        %v647 = vld [vmem:[#allocation3] sm:$0xff]
        %v648 = vld [vmem:[#allocation3 + $0x8] sm:$0xf]
        %v649 = vadd.s32 %v266, 2
        %v650 = vadd.s32 %v267, 2
        %vm651 = vcmp.ge.s32.totalorder %v649, 0
        %vm652 = vcmp.ge.s32.totalorder %v650, 0
        %vm653 = vcmp.lt.s32.totalorder %v649, 16
        %vm654 = vcmp.lt.s32.totalorder %v650, 16
        %vm655 = vmand %vm651, %vm653
        %vm656 = vmand %vm652, %vm654
        %v657 = vsel %vm655, 1, 0
        %v658 = vsel %vm656, 1, 0
        %vm659 = vcmp.eq.s32.totalorder %v657, 1
        %vm660 = vcmp.eq.s32.totalorder %v658, 1
        %v663 = vcombine.high %v647, %v647
        %664 = vrot.lane.b32.xlu0 %v647, 124
        %v665 = vpop.permute.xlu0 %664
        %666 = vrot.lane.b32.xlu0 %v663, 124
        %v667 = vpop.permute.xlu0 %666
        %668 = vrot.lane.b32.xlu0 %v648, 124
        %v669 = vpop.permute.xlu0 %668
        %vm670 = vcmask 1014784
        %v671 = vsel %vm670, %v665, %v667
        %v672 = vsel %vm670, %v667, %v669
        %v675 = vsel %vm659, %v671, 0.0
        %v676 = vsel %vm660, %v672, 0.0
        %677 = vst [vmem:[#allocation4 + $0x10] sm:$0xf] %v675
        %678 = vst [vmem:[#allocation4 + $0x18] sm:$0xf] %v676
        %v679 = vld [vmem:[#allocation3] sm:$0xff]
        %v680 = vld [vmem:[#allocation3 + $0x8] sm:$0xf]
        %v683 = vcombine.high %v679, %v679
        %684 = vrot.lane.b32.xlu0 %v679, 96
        %v685 = vpop.permute.xlu0 %684
        %686 = vrot.lane.b32.xlu0 %v683, 96
        %v687 = vpop.permute.xlu0 %686
        %688 = vrot.lane.b32.xlu0 %v680, 96
        %v689 = vpop.permute.xlu0 %688
        %v690 = vsel %vm438, %v685, %v687
        %v691 = vsel %vm438, %v687, %v689
        %v694 = vsel %vm620, %v690, 0.0
        %v695 = vsel %vm621, %v691, 0.0
        %v698 = vrot.slane %v694, 4
        %v699 = vrot.slane %v695, 4
        %702 = vst [vmem:[#allocation4 + $0x10] sm:$0xf0] %v698
        %703 = vst [vmem:[#allocation4 + $0x18] sm:$0xf0] %v699
        %v704 = vld [vmem:[#allocation3] sm:$0xff]
        %v705 = vld [vmem:[#allocation3 + $0x8] sm:$0xf]
        %v708 = vcombine.high %v704, %v704
        %709 = vrot.lane.b32.xlu0 %v704, 94
        %v710 = vpop.permute.xlu0 %709
        %711 = vrot.lane.b32.xlu0 %v708, 94
        %v712 = vpop.permute.xlu0 %711
        %713 = vrot.lane.b32.xlu0 %v705, 94
        %v714 = vpop.permute.xlu0 %713
        %v715 = vsel %vm477, %v710, %v712
        %v716 = vsel %vm477, %v712, %v714
        %719 = vst [vmem:[#allocation4 + $0x20] sm:$0xf] %v715
        %720 = vst [vmem:[#allocation4 + $0x28] sm:$0xf] %v716
        %v721 = vld [vmem:[#allocation3] sm:$0xff]
        %v722 = vld [vmem:[#allocation3 + $0x8] sm:$0xf]
        %v725 = vcombine.high %v721, %v721
        %726 = vrot.lane.b32.xlu0 %v721, 92
        %v727 = vpop.permute.xlu0 %726
        %728 = vrot.lane.b32.xlu0 %v725, 92
        %v729 = vpop.permute.xlu0 %728
        %730 = vrot.lane.b32.xlu0 %v722, 92
        %v731 = vpop.permute.xlu0 %730
        %vm732 = vcmask 752640
        %v733 = vsel %vm732, %v727, %v729
        %v734 = vsel %vm732, %v729, %v731
        %v737 = vsel %vm659, %v733, 0.0
        %v738 = vsel %vm660, %v734, 0.0
        %v741 = vrot.slane %v737, 4
        %v742 = vrot.slane %v738, 4
        %745 = vst [vmem:[#allocation4 + $0x20] sm:$0xf0] %v741
        %746 = vst [vmem:[#allocation4 + $0x28] sm:$0xf0] %v742
        %v747 = vld [vmem:[#allocation3] sm:$0xff]
        %v748 = vld [vmem:[#allocation3 + $0x8] sm:$0xf]
        %v751 = vcombine.high %v747, %v747
        %752 = vrot.lane.b32.xlu0 %v747, 64
        %v753 = vpop.permute.xlu0 %752
        %754 = vrot.lane.b32.xlu0 %v751, 64
        %v755 = vpop.permute.xlu0 %754
        %756 = vrot.lane.b32.xlu0 %v748, 64
        %v757 = vpop.permute.xlu0 %756
        %vm758 = vcmask 523264
        %v759 = vsel %vm758, %v753, %v755
        %v760 = vsel %vm758, %v755, %v757
        %v763 = vsel %vm620, %v759, 0.0
        %v764 = vsel %vm621, %v760, 0.0
        %765 = vst [vmem:[#allocation4 + $0x30] sm:$0xf] %v763
        %766 = vst [vmem:[#allocation4 + $0x38] sm:$0xf] %v764
        %v767 = vld [vmem:[#allocation3] sm:$0xff]
        %v768 = vld [vmem:[#allocation3 + $0x8] sm:$0xf]
        %v771 = vcombine.low %v767, %v767
        %v772 = vcombine.low %v768, %v768
        %773 = vrot.lane.b32.xlu0 %v771, 62
        %v774 = vpop.permute.xlu0 %773
        %775 = vrot.lane.b32.xlu0 %v767, 62
        %v776 = vpop.permute.xlu0 %775
        %777 = vrot.lane.b32.xlu0 %v772, 62
        %v778 = vpop.permute.xlu0 %777
        %vm779 = vcmask 506880
        %v780 = vsel %vm779, %v774, %v776
        %v781 = vsel %vm779, %v776, %v778
        %784 = vst [vmem:[#allocation4 + $0x30] sm:$0xf0] %v780
        %785 = vst [vmem:[#allocation4 + $0x38] sm:$0xf0] %v781
        %v786 = vld [vmem:[#allocation3] sm:$0xff]
        %v787 = vld [vmem:[#allocation3 + $0x8] sm:$0xf]
        %v790 = vcombine.high %v786, %v786
        %791 = vrot.lane.b32.xlu0 %v786, 60
        %v792 = vpop.permute.xlu0 %791
        %793 = vrot.lane.b32.xlu0 %v790, 60
        %v794 = vpop.permute.xlu0 %793
        %795 = vrot.lane.b32.xlu0 %v787, 60
        %v796 = vpop.permute.xlu0 %795
        %vm797 = vcmask 490496
        %v798 = vsel %vm797, %v792, %v794
        %v799 = vsel %vm797, %v794, %v796
        %v802 = vsel %vm659, %v798, 0.0
        %v803 = vsel %vm660, %v799, 0.0
        %804 = vst [vmem:[#allocation4 + $0x40] sm:$0xf] %v802
        %805 = vst [vmem:[#allocation4 + $0x48] sm:$0xf] %v803
        %v806 = vld [vmem:[%s3] sm:$0xf]
        %v807 = vld [vmem:[#allocation4] sm:$0xff]
        %v808 = vld [vmem:[#allocation4 + $0x8] sm:$0xff]
        %v809 = vld [vmem:[#allocation4 + $0x10] sm:$0xff]
        %v810 = vld [vmem:[#allocation4 + $0x18] sm:$0xff]
        %v811 = vld [vmem:[#allocation4 + $0x20] sm:$0xff]
        %v812 = vld [vmem:[#allocation4 + $0x28] sm:$0xff]
        %v813 = vld [vmem:[#allocation4 + $0x30] sm:$0xff]
        %v814 = vld [vmem:[#allocation4 + $0x38] sm:$0xff]
        %v815 = vld [vmem:[#allocation4 + $0x40] sm:$0xf]
        %v816 = vld [vmem:[#allocation4 + $0x48] sm:$0xf]
        %v817 = vld [vmem:[%s4] sm:$0xf]
        %819 = vset.pattern.permute.xlu0 0
        %820 = vperm.xlu0 %819, %v817
        %v821 = vpop.permute.xlu0 %820
        %v824 = vsel %vm503, %v806, 0
        %v827 = vsel %vm507, %v815, 0
        %v830 = vsel %vm507, %v816, 0
        %832 = vmatprep.subr.mxu0 %v808
        %833 = vmatpush1.msra.mxu0 %v807
        %834 = vmatprep.subr.mxu0 %v810
        %835 = vmatpush1.msra.mxu0 %v809
        %836 = vmatprep.subr.mxu0 %v812
        %837 = vmatpush1.msra.mxu0 %v811
        %838 = vmatprep.subr.mxu0 %v814
        %839 = vmatpush1.msra.mxu0 %v813
        %840 = vmatprep.subr.mxu0 %v830
        %841 = vmatpush1.msra.mxu0 %v827
        %842 = vmatprep.subr.mxu0 0.0
        %843 = vmatpush1.msra.mxu0 0.0
        %844 = vmatprep.subr.mxu0 0.0
        %845 = vmatpush1.msra.mxu0 0.0
        %846 = vmatprep.subr.mxu0 0.0
        %847 = vmatpush1.msra.mxu0 0.0
        %848 = vmatprep.subr.mxu0 0.0
        %849 = vmatpush1.msra.mxu0 0.0
        %850 = vmatprep.subr.mxu0 0.0
        %851 = vmatpush1.msra.mxu0 0.0
        %852 = vmatprep.subr.mxu0 0.0
        %853 = vmatpush1.msra.mxu0 0.0
        %854 = vmatprep.subr.mxu0 0.0
        %855 = vmatpush1.msra.mxu0 0.0
        %856 = vmatprep.subr.mxu0 0.0
        %857 = vmatpush1.msra.mxu0 0.0
        %858 = vmatprep.subr.mxu0 0.0
        %859 = vmatpush1.msra.mxu0 0.0
        %860 = vmatprep.subr.mxu0 0.0
        %861 = vmatpush1.msra.mxu0 0.0
        %862 = vmatprep.subr.mxu0 0.0
        %863 = vmatpush1.msra.mxu0 0.0
        %864 = vmatprep.subr.mxu0 0.0
        %865 = vmatpush1.msra.mxu0 0.0
        %866 = vmatprep.subr.mxu0 0.0
        %867 = vmatpush1.msra.mxu0 0.0
        %868 = vmatprep.subr.mxu0 0.0
        %869 = vmatpush1.msra.mxu0 0.0
        %870 = vmatprep.subr.mxu0 0.0
        %871 = vmatpush1.msra.mxu0 0.0
        %872 = vmatprep.subr.mxu0 0.0
        %873 = vmatpush1.msra.mxu0 0.0
        %874 = vmatprep.subr.mxu0 0.0
        %875 = vmatpush1.msra.mxu0 0.0
        %876 = vmatprep.subr.mxu0 0.0
        %877 = vmatpush1.msra.mxu0 0.0
        %878 = vmatprep.subr.mxu0 0.0
        %879 = vmatpush1.msra.mxu0 0.0
        %880 = vmatprep.subr.mxu0 0.0
        %881 = vmatpush1.msra.mxu0 0.0
        %882 = vmatprep.subr.mxu0 0.0
        %883 = vmatpush1.msra.mxu0 0.0
        %884 = vmatprep.subr.mxu0 0.0
        %885 = vmatpush1.msra.mxu0 0.0
        %886 = vmatprep.subr.mxu0 0.0
        %887 = vmatpush1.msra.mxu0 0.0
        %888 = vmatprep.subr.mxu0 0.0
        %889 = vmatpush1.msra.mxu0 0.0
        %890 = vmatprep.subr.mxu0 0.0
        %891 = vmatpush1.msra.mxu0 0.0
        %892 = vmatprep.subr.mxu0 0.0
        %893 = vmatpush1.msra.mxu0 0.0
        %894 = vmatprep.subr.mxu0 0.0
        %895 = vmatpush1.msra.mxu0 0.0
        %896 = vmatprep.mubr.f32.mxu0 0.0
        %897 = vmatmul.mubr.f32.gmra.mrb[0].mxu0 %v824
        %v898 = vpop.f32.mrb[0].mxu0
        %v899 = vadd.f32 %v821, %v898
        %v900 = vpop.f32.mrb[0].mxu0
        %v901 = vadd.f32 %v821, %v900
        %902 = vdwg.mxu0
        %v903 = vld [vmem:[%s214] sm:$0xff]
        %v905 = vcombine.high %v903, %v903
        %v907 = vadd.f32 %v899, %v903
        %v908 = vadd.f32 %v901, %v905
        %v911 = vcombine.low %v907, %v908
        %913 = vst [vmem:[%s240] sm:$0xff] %v911
        %s914 = sand.u32 %s140, 1
        %s915 = scalar_lea.sflag [#allocation7], %s914
        %s916 = sand.u32 %s140, 1
        %s917 = smul.addr %s916, 8
        %s918 = scalar_lea.vmem [#allocation8], %s917
        // Predicated region
        $region45: #{tpu_custom_call.1} parent=39 // pred_check
          %p919 = pneg %p150
        $region46: #{tpu_custom_call.1} parent=39 // pred_check_branch
          %921 = sbr.rel (%p919) target = $region48
        $region47: #{tpu_custom_call.1} parent=39 // pred_region
          %s923 = ssub.s32 128, 128
          %924 = vsyncadd %s915, %s923
          %s925 = smul.addr %s22, 2
          %s926 = smul.addr %s925, 64
          %s927 = scalar_lea.hbm %s5, %s926
          %s929 = sshll.u32 %s918, 4
          %s930 = int_to_ptr.vmem [resolvable:$true] %s929
          %932 = dma.vmem_to_hbm [thread:$0]  %s930, 128, %s927, %s915
        $region48: #{tpu_custom_call.1} parent=39 // pred_fallthru
          _
      $region40: #{tpu_custom_call.1} parent=5 // pred_fallthru
        _
      %p933 = scmp.le.s32.totalorder 2, %s17
      // Predicated region
      $region49: #{tpu_custom_call.1} parent=5 // pred_check
        %p934 = pneg %p933
      $region50: #{tpu_custom_call.1} parent=5 // pred_check_branch
        %936 = sbr.rel (%p934) target = $region52
      $region51: #{tpu_custom_call.1} parent=5 // pred_region
        %s937 = ssub.s32 %s17, 2
        // Predicated region
        $region53: #{tpu_custom_call.1} parent=51 // pred_check
          %p938 = pneg %p156
        $region54: #{tpu_custom_call.1} parent=51 // pred_check_branch
          %940 = sbr.rel (%p938) target = $region56
        $region55: #{tpu_custom_call.1} parent=51 // pred_region
          %s941 = sand.u32 %s141, 1
          %s942 = scalar_lea.sflag [#allocation7], %s941
          %s943 = sand.u32 %s141, 1
          %s944 = smul.addr %s943, 8
          %s945 = scalar_lea.vmem [#allocation8], %s944
          %946 = dma.done %s942, 128
        $region56: #{tpu_custom_call.1} parent=51 // pred_fallthru
          _
      $region52: #{tpu_custom_call.1} parent=5 // pred_fallthru
        _
    $region6: #{tpu_custom_call.1} parent=1 // loop_footer
      %s21 = sadd.s32 1, %s17
    $region7: #{tpu_custom_call.1} parent=1 // loop_footer_branch
      %16 = sbr.rel target = $region3
    $region8: #{tpu_custom_call.1} parent=1 // loop_exit
      _
    %947 = vsyncpa [#allocation6], 1
    %s948 = scalar_lea.sflag [#allocation6], 1
    %949 = vsyncpa %s948, 1
    %950 = vsyncpa [#allocation7], 1
    %s951 = scalar_lea.sflag [#allocation7], 1
    %952 = vsyncpa %s951, 1

</llo_original>
